<compile_context>
chip_gen: v5e
topology: v5e:2x2
jax: 0.10.0
libtpu: 0.0.40
codegen_flags: <defaults>
</compile_context>

<pallas_src>
import jax
import jax.numpy as jnp
from jax.experimental import pallas as pl
from jax.experimental.pallas import tpu as pltpu

HIDDEN = 512
N_HIDDEN_LAYERS = 7              # seven Linear(.,512)+ReLU(+Dropout) blocks
N_UNIFORM = N_HIDDEN_LAYERS - 1  # six 512x512 hidden weights (stacked)
OUT_PAD = 128                    # lane-dense padded output width
NEG_INF = -1e30
TB_MAX = 256                     # batch tile for the throughput path


def _round_up(x, m):
    return (x + m - 1) // m * m


# --------------------------------------------------------------------------
# Kernel 1: throughput path.  Grid over batch tiles; all weights resident.
# --------------------------------------------------------------------------
def _mlp_resident_kernel(x_ref, w_in_ref, w_hid_ref, w_out_ref, b_ref, out_ref):
    """x_ref [tb,in_dim] f32; w_* bf16; b_ref [8,1,512] f32; out_ref [tb,128] f32."""
    # Layer 0: in_dim -> 512 (bf16 operands, f32 MXU accumulation).
    h = jnp.dot(x_ref[...].astype(jnp.bfloat16), w_in_ref[...],
                preferred_element_type=jnp.float32)
    h = jnp.maximum(h + b_ref[0], 0.0)

    # Layers 1..6: 512 -> 512.
    for l in range(N_UNIFORM):
        h = jnp.dot(h.astype(jnp.bfloat16), w_hid_ref[l],
                    preferred_element_type=jnp.float32)
        h = jnp.maximum(h + b_ref[l + 1], 0.0)

    # Output layer (padded to OUT_PAD lanes) + numerically stable softmax.
    logits = jnp.dot(h.astype(jnp.bfloat16), w_out_ref[...],
                     preferred_element_type=jnp.float32)
    logits = logits + b_ref[N_HIDDEN_LAYERS][:, :OUT_PAD]
    m = jnp.max(logits, axis=-1, keepdims=True)
    e = jnp.exp(logits - m)                       # pad cols: exp(-1e30 - m) == 0
    s = jnp.sum(e, axis=-1, keepdims=True)
    out_ref[...] = (e * pl.reciprocal(s, approx=True)).astype(out_ref.dtype)


# --------------------------------------------------------------------------
# Kernel 2: latency path (single batch tile).  Grid over layers so the next
# layer's weights are DMA'd while the current layer computes.
# --------------------------------------------------------------------------
def _mlp_layerwise_kernel(x_ref, w_in_ref, w_hid_ref, w_out_ref, b_ref,
                          out_ref, h_ref):
    """Grid axis 0 = layer index (0..7).  h_ref [tb,512] f32 scratch carries
    the running activation across layer iterations."""
    l = pl.program_id(0)
    last = pl.num_programs(0) - 1

    @pl.when(l == 0)
    def _():
        h = jnp.dot(x_ref[...].astype(jnp.bfloat16), w_in_ref[...],
                    preferred_element_type=jnp.float32)
        h_ref[...] = jnp.maximum(h + b_ref[0], 0.0)

    @pl.when(jnp.logical_and(l >= 1, l < last))
    def _():
        h = jnp.dot(h_ref[...].astype(jnp.bfloat16), w_hid_ref[0],
                    preferred_element_type=jnp.float32)
        h_ref[...] = jnp.maximum(h + b_ref[l], 0.0)   # bias row l (dynamic, leading dim)

    @pl.when(l == last)
    def _():
        logits = jnp.dot(h_ref[...].astype(jnp.bfloat16), w_out_ref[...],
                         preferred_element_type=jnp.float32)
        logits = logits + b_ref[N_HIDDEN_LAYERS][:, :OUT_PAD]
        m = jnp.max(logits, axis=-1, keepdims=True)
        e = jnp.exp(logits - m)
        s = jnp.sum(e, axis=-1, keepdims=True)
        out_ref[...] = (e * pl.reciprocal(s, approx=True)).astype(out_ref.dtype)


# --------------------------------------------------------------------------
# Parameter construction / packing
# --------------------------------------------------------------------------
def init_params(key, in_dim, out_dim, hidden=HIDDEN):
    """Deterministic synthetic params with PyTorch Linear-like fan-in scaling.
    Weights are stored (fan_in, fan_out) so the kernel computes x @ W + b."""
    dims = [in_dim] + [hidden] * N_HIDDEN_LAYERS + [out_dim]
    params = []
    for i in range(len(dims) - 1):
        key, kw, kb = jax.random.split(key, 3)
        fan_in, fan_out = dims[i], dims[i + 1]
        bound = 1.0 / jnp.sqrt(fan_in)
        w = jax.random.uniform(kw, (fan_in, fan_out), jnp.float32, -bound, bound)
        b = jax.random.uniform(kb, (fan_out,), jnp.float32, -bound, bound)
        params.append((w, b))
    return params


def pack_params(params, out_dim):
    """Pack 8 (w, b) f32 pairs into the kernel's 4 operands (bf16 weights)."""
    assert len(params) == N_HIDDEN_LAYERS + 1
    assert out_dim <= OUT_PAD

    w_in = params[0][0].astype(jnp.bfloat16)                           # [in_dim, 512]
    w_hid = jnp.stack([params[i][0] for i in range(1, N_HIDDEN_LAYERS)]
                      ).astype(jnp.bfloat16)                           # [6, 512, 512]
    w_out = jnp.zeros((HIDDEN, OUT_PAD), jnp.float32)
    w_out = w_out.at[:, :out_dim].set(params[-1][0]).astype(jnp.bfloat16)

    # Biases packed [8, 1, 512]; row 7 holds the padded output bias
    # (-1e30 in pad columns so softmax assigns them probability 0).
    b_pack = jnp.zeros((N_HIDDEN_LAYERS + 1, 1, HIDDEN), jnp.float32)
    for i in range(N_HIDDEN_LAYERS):
        b_pack = b_pack.at[i, 0, :].set(params[i][1])
    last = jnp.full((OUT_PAD,), NEG_INF, jnp.float32).at[:out_dim].set(params[-1][1])
    b_pack = b_pack.at[N_HIDDEN_LAYERS, 0, :OUT_PAD].set(last)
    return w_in, w_hid, w_out, b_pack


# --------------------------------------------------------------------------
# Wrappers
# --------------------------------------------------------------------------
def _forward_single_tile(obs, w_in, w_hid, w_out, b_pack):
    """B <= TB_MAX: one batch tile, layer-pipelined kernel (grid over layers)."""
    B, in_dim = obs.shape
    tb = _round_up(B, 8)
    if tb != B:
        obs = jnp.pad(obs, ((0, tb - B), (0, 0)))

    n_layers = N_HIDDEN_LAYERS + 1
    return pl.pallas_call(
        _mlp_layerwise_kernel,
        out_shape=jax.ShapeDtypeStruct((tb, OUT_PAD), jnp.float32),
        grid=(n_layers,),
        in_specs=[
            pl.BlockSpec((tb, in_dim), lambda l: (0, 0)),
            pl.BlockSpec((in_dim, HIDDEN), lambda l: (0, 0)),
            # hidden weight l-1 for layers 1..6; clamped (unused) at l=0 / l=7
            pl.BlockSpec((1, HIDDEN, HIDDEN),
                         lambda l: (jnp.minimum(jnp.maximum(l - 1, 0),
                                                N_UNIFORM - 1), 0, 0)),
            pl.BlockSpec((HIDDEN, OUT_PAD), lambda l: (0, 0)),
            pl.BlockSpec((N_HIDDEN_LAYERS + 1, 1, HIDDEN), lambda l: (0, 0, 0)),
        ],
        out_specs=pl.BlockSpec((tb, OUT_PAD), lambda l: (0, 0)),
        scratch_shapes=[pltpu.VMEM((tb, HIDDEN), jnp.float32)],
        compiler_params=pltpu.CompilerParams(
            dimension_semantics=("arbitrary",)),
    )(obs, w_in, w_hid, w_out, b_pack)


def _forward_batched(obs, w_in, w_hid, w_out, b_pack):
    """B > TB_MAX: batch tiles of 256 rows, weights resident across tiles."""
    B, in_dim = obs.shape
    tb = TB_MAX
    b_pad = _round_up(B, tb)
    if b_pad != B:
        obs = jnp.pad(obs, ((0, b_pad - B), (0, 0)))

    return pl.pallas_call(
        _mlp_resident_kernel,
        out_shape=jax.ShapeDtypeStruct((b_pad, OUT_PAD), jnp.float32),
        grid=(b_pad // tb,),
        in_specs=[
            pl.BlockSpec((tb, in_dim), lambda i: (i, 0)),
            pl.BlockSpec((in_dim, HIDDEN), lambda i: (0, 0)),
            pl.BlockSpec((N_UNIFORM, HIDDEN, HIDDEN), lambda i: (0, 0, 0)),
            pl.BlockSpec((HIDDEN, OUT_PAD), lambda i: (0, 0)),
            pl.BlockSpec((N_HIDDEN_LAYERS + 1, 1, HIDDEN), lambda i: (0, 0, 0)),
        ],
        out_specs=pl.BlockSpec((tb, OUT_PAD), lambda i: (i, 0)),
        compiler_params=pltpu.CompilerParams(
            dimension_semantics=("parallel",)),
    )(obs, w_in, w_hid, w_out, b_pack)


def network_forward(obs, packed, out_dim):
    """obs: [B, in_dim] f32 -> [B, out_dim] softmax probabilities."""
    w_in, w_hid, w_out, b_pack = packed
    B = obs.shape[0]
    if B <= TB_MAX:
        out = _forward_single_tile(obs, w_in, w_hid, w_out, b_pack)
    else:
        out = _forward_batched(obs, w_in, w_hid, w_out, b_pack)
    return out[:B, :out_dim]


# --------------------------------------------------------------------------
# Pure-JAX references
# --------------------------------------------------------------------------
def network_forward_ref_f32(obs, params):
    """f32 reference (original PyTorch eval-mode semantics)."""
    h = obs
    n = len(params)
    for i, (w, b) in enumerate(params):
        h = h @ w + b
        if i < n - 1:
            h = jnp.maximum(h, 0.0)
    return jax.nn.softmax(h, axis=-1)


def network_forward_ref_bf16(obs, params):
    """Reference matching the kernel's precision (bf16 operands, f32 acc)."""
    h = obs.astype(jnp.float32)
    n = len(params)
    for i, (w, b) in enumerate(params):
        h = jnp.dot(h.astype(jnp.bfloat16), w.astype(jnp.bfloat16),
                    preferred_element_type=jnp.float32) + b
        if i < n - 1:
            h = jnp.maximum(h, 0.0)
    return jax.nn.softmax(h, axis=-1)


if __name__ == "__main__":
    key = jax.random.PRNGKey(0)
    k_obs, k_params, k_obs2 = jax.random.split(key, 3)

    in_dim, out_dim = 32, 8
    params = init_params(k_params, in_dim, out_dim)
    packed = pack_params(params, out_dim)

    # ---- Latency path: small batch, single tile, layer-pipelined kernel ----
    B = 8
    obs = jax.random.normal(k_obs, (B, in_dim), dtype=jnp.float32)
    out = jax.block_until_ready(network_forward(obs, packed, out_dim))

    assert out.shape == (B, out_dim)
    # approx reciprocal -> rows sum to 1 within EUP-rcp relative error
    assert jnp.allclose(jnp.sum(out, axis=-1), 1.0, atol=5e-3)
    ref_bf16 = network_forward_ref_bf16(obs, params)   # same precision as kernel
    ref_f32 = network_forward_ref_f32(obs, params)     # original f32 semantics
    assert jnp.allclose(out, ref_bf16, atol=5e-3, rtol=1e-2)
    assert jnp.allclose(out, ref_f32, atol=5e-2)

    # ---- Throughput path: multi-tile batch (tb=256, weights resident) ----
    B2 = 300
    obs2 = jax.random.normal(k_obs2, (B2, in_dim), dtype=jnp.float32)
    out2 = jax.block_until_ready(network_forward(obs2, packed, out_dim))

    assert out2.shape == (B2, out_dim)
    assert jnp.allclose(jnp.sum(out2, axis=-1), 1.0, atol=5e-3)
    ref2 = network_forward_ref_bf16(obs2, params)
    assert jnp.allclose(out2, ref2, atol=5e-3, rtol=1e-2)

    print("KERNEL_OK")
</pallas_src>

<mosaic_0001>
module attributes {stable_mosaic.version = 11 : i64} {
  func.func @_mlp_layerwise_kernel(%arg0: i32, %arg1: memref<8x32xf32, #tpu.memory_space<vmem>>, %arg2: memref<32x512xbf16, #tpu.memory_space<vmem>>, %arg3: memref<1x512x512xbf16, #tpu.memory_space<vmem>>, %arg4: memref<512x128xbf16, #tpu.memory_space<vmem>>, %arg5: memref<8x1x512xf32, #tpu.memory_space<vmem>>, %arg6: memref<8x128xf32, #tpu.memory_space<vmem>>, %arg7: memref<8x512xf32, #tpu.memory_space<vmem>>) attributes {dimension_semantics = [#tpu.dimension_semantics<arbitrary>], iteration_bounds = array<i64: 8>, scalar_prefetch = 0 : i64, scratch_operands = 1 : i64, tpu.core_type = #tpu.core_type<tc>, window_params = [{pipeline_mode = #tpu.pipeline_mode<synchronous>, transform_indices = @transform_0, window_bounds = array<i64: 8, 32>}, {pipeline_mode = #tpu.pipeline_mode<synchronous>, transform_indices = @transform_1, window_bounds = array<i64: 32, 512>}, {transform_indices = @transform_2, window_bounds = array<i64: 1, 512, 512>}, {pipeline_mode = #tpu.pipeline_mode<synchronous>, transform_indices = @transform_3, window_bounds = array<i64: 512, 128>}, {pipeline_mode = #tpu.pipeline_mode<synchronous>, transform_indices = @transform_4, window_bounds = array<i64: 8, 1, 512>}, {pipeline_mode = #tpu.pipeline_mode<synchronous>, transform_indices = @transform_5, window_bounds = array<i64: 8, 128>}]} {
    %c0_i32 = arith.constant 0 : i32
    %0 = arith.cmpi eq, %arg0, %c0_i32 : i32
    %1 = arith.extui %0 : i1 to i32
    %c0_i32_0 = arith.constant 0 : i32
    %2 = arith.cmpi ne, %1, %c0_i32_0 : i32
    scf.if %2 {
      %c0 = arith.constant 0 : index
      %c0_4 = arith.constant 0 : index
      %11 = vector.load %arg1[%c0, %c0_4] : memref<8x32xf32, #tpu.memory_space<vmem>>, vector<8x32xf32>
      %12 = arith.truncf %11 : vector<8x32xf32> to vector<8x32xbf16>
      %c0_5 = arith.constant 0 : index
      %c0_6 = arith.constant 0 : index
      %13 = vector.load %arg2[%c0_5, %c0_6] : memref<32x512xbf16, #tpu.memory_space<vmem>>, vector<32x512xbf16>
      %cst = arith.constant dense<0.000000e+00> : vector<8x512xf32>
      %14 = tpu.matmul %12, %13, %cst {dimension_numbers = #tpu.dot_dimension_numbers<[1], [0], [0], [1], [0, 0, 1, 1], [], []>} : vector<8x32xbf16>, vector<32x512xbf16>, vector<8x512xf32> -> vector<8x512xf32>
      %c0_7 = arith.constant 0 : index
      %c0_8 = arith.constant 0 : index
      %c0_9 = arith.constant 0 : index
      %15 = vector.load %arg5[%c0_7, %c0_8, %c0_9] : memref<8x1x512xf32, #tpu.memory_space<vmem>>, vector<1x1x512xf32>
      %16 = vector.shape_cast %15 : vector<1x1x512xf32> to vector<1x512xf32>
      %17 = vector.broadcast %16 : vector<1x512xf32> to vector<8x512xf32>
      %18 = arith.addf %14, %17 : vector<8x512xf32>
      %cst_10 = arith.constant 0.000000e+00 : f32
      %19 = vector.broadcast %cst_10 : f32 to vector<8x512xf32>
      %20 = arith.maximumf %18, %19 : vector<8x512xf32>
      %c0_11 = arith.constant 0 : index
      %c0_12 = arith.constant 0 : index
      %21 = vector.load %arg7[%c0_11, %c0_12] : memref<8x512xf32, #tpu.memory_space<vmem>>, vector<8x512xf32>
      tpu.vector_store %arg7[%c0_11, %c0_12], %20 {strides = array<i32>} : memref<8x512xf32, #tpu.memory_space<vmem>>, vector<8x512xf32>,
    } else {
    }
    %c1_i32 = arith.constant 1 : i32
    %3 = arith.cmpi sge, %arg0, %c1_i32 : i32
    %c7_i32 = arith.constant 7 : i32
    %4 = arith.cmpi slt, %arg0, %c7_i32 : i32
    %5 = arith.andi %3, %4 : i1
    %6 = arith.extui %5 : i1 to i32
    %c0_i32_1 = arith.constant 0 : i32
    %7 = arith.cmpi ne, %6, %c0_i32_1 : i32
    scf.if %7 {
      %c0 = arith.constant 0 : index
      %c0_4 = arith.constant 0 : index
      %11 = vector.load %arg7[%c0, %c0_4] : memref<8x512xf32, #tpu.memory_space<vmem>>, vector<8x512xf32>
      %12 = arith.truncf %11 : vector<8x512xf32> to vector<8x512xbf16>
      %c0_5 = arith.constant 0 : index
      %c0_6 = arith.constant 0 : index
      %c0_7 = arith.constant 0 : index
      %13 = vector.load %arg3[%c0_5, %c0_6, %c0_7] : memref<1x512x512xbf16, #tpu.memory_space<vmem>>, vector<1x512x512xbf16>
      %14 = vector.shape_cast %13 : vector<1x512x512xbf16> to vector<512x512xbf16>
      %cst = arith.constant dense<0.000000e+00> : vector<8x512xf32>
      %15 = tpu.matmul %12, %14, %cst {dimension_numbers = #tpu.dot_dimension_numbers<[1], [0], [0], [1], [0, 0, 1, 1], [], []>} : vector<8x512xbf16>, vector<512x512xbf16>, vector<8x512xf32> -> vector<8x512xf32>
      %16 = arith.index_cast %arg0 : i32 to index
      %c0_8 = arith.constant 0 : index
      %c0_9 = arith.constant 0 : index
      %17 = vector.load %arg5[%16, %c0_8, %c0_9] : memref<8x1x512xf32, #tpu.memory_space<vmem>>, vector<1x1x512xf32>
      %18 = vector.shape_cast %17 : vector<1x1x512xf32> to vector<1x512xf32>
      %19 = vector.broadcast %18 : vector<1x512xf32> to vector<8x512xf32>
      %20 = arith.addf %15, %19 : vector<8x512xf32>
      %cst_10 = arith.constant 0.000000e+00 : f32
      %21 = vector.broadcast %cst_10 : f32 to vector<8x512xf32>
      %22 = arith.maximumf %20, %21 : vector<8x512xf32>
      %c0_11 = arith.constant 0 : index
      %c0_12 = arith.constant 0 : index
      %23 = vector.load %arg7[%c0_11, %c0_12] : memref<8x512xf32, #tpu.memory_space<vmem>>, vector<8x512xf32>
      tpu.vector_store %arg7[%c0_11, %c0_12], %22 {strides = array<i32>} : memref<8x512xf32, #tpu.memory_space<vmem>>, vector<8x512xf32>,
    } else {
    }
    %c7_i32_2 = arith.constant 7 : i32
    %8 = arith.cmpi eq, %arg0, %c7_i32_2 : i32
    %9 = arith.extui %8 : i1 to i32
    %c0_i32_3 = arith.constant 0 : i32
    %10 = arith.cmpi ne, %9, %c0_i32_3 : i32
    scf.if %10 {
      %c0 = arith.constant 0 : index
      %c0_4 = arith.constant 0 : index
      %11 = vector.load %arg7[%c0, %c0_4] : memref<8x512xf32, #tpu.memory_space<vmem>>, vector<8x512xf32>
      %12 = arith.truncf %11 : vector<8x512xf32> to vector<8x512xbf16>
      %c0_5 = arith.constant 0 : index
      %c0_6 = arith.constant 0 : index
      %13 = vector.load %arg4[%c0_5, %c0_6] : memref<512x128xbf16, #tpu.memory_space<vmem>>, vector<512x128xbf16>
      %cst = arith.constant dense<0.000000e+00> : vector<8x128xf32>
      %14 = tpu.matmul %12, %13, %cst {dimension_numbers = #tpu.dot_dimension_numbers<[1], [0], [0], [1], [0, 0, 1, 1], [], []>} : vector<8x512xbf16>, vector<512x128xbf16>, vector<8x128xf32> -> vector<8x128xf32>
      %c7 = arith.constant 7 : index
      %c0_7 = arith.constant 0 : index
      %c0_8 = arith.constant 0 : index
      %15 = vector.load %arg5[%c7, %c0_7, %c0_8] : memref<8x1x512xf32, #tpu.memory_space<vmem>>, vector<1x1x512xf32>
      %16 = vector.shape_cast %15 : vector<1x1x512xf32> to vector<1x512xf32>
      %17 = vector.extract_strided_slice %16 {offsets = [0, 0], sizes = [1, 128], strides = [1, 1]} : vector<1x512xf32> to vector<1x128xf32>
      %18 = vector.broadcast %17 : vector<1x128xf32> to vector<8x128xf32>
      %19 = arith.addf %14, %18 : vector<8x128xf32>
      %cst_9 = arith.constant dense<0xFF800000> : vector<8xf32>
      %20 = vector.multi_reduction <maximumf>, %19, %cst_9 [1] : vector<8x128xf32> to vector<8xf32>
      %21 = vector.shape_cast %20 : vector<8xf32> to vector<8x1xf32>
      %22 = vector.broadcast %21 : vector<8x1xf32> to vector<8x128xf32>
      %23 = arith.subf %19, %22 : vector<8x128xf32>
      %24 = math.exp %23 : vector<8x128xf32>
      %cst_10 = arith.constant dense<0.000000e+00> : vector<8xf32>
      %25 = vector.multi_reduction <add>, %24, %cst_10 [1] : vector<8x128xf32> to vector<8xf32>
      %26 = vector.shape_cast %25 : vector<8xf32> to vector<8x1xf32>
      %27 = tpu.reciprocal %26 {approx = true} : vector<8x1xf32> -> vector<8x1xf32>
      %28 = vector.broadcast %27 : vector<8x1xf32> to vector<8x128xf32>
      %29 = arith.mulf %24, %28 : vector<8x128xf32>
      %c0_11 = arith.constant 0 : index
      %c0_12 = arith.constant 0 : index
      %30 = vector.load %arg6[%c0_11, %c0_12] : memref<8x128xf32, #tpu.memory_space<vmem>>, vector<8x128xf32>
      tpu.vector_store %arg6[%c0_11, %c0_12], %29 {strides = array<i32>} : memref<8x128xf32, #tpu.memory_space<vmem>>, vector<8x128xf32>,
    } else {
    }
    return
  }
  func.func @transform_0(%arg0: i32) -> (i32, i32) {
    %c0_i32 = arith.constant 0 : i32
    %c0_i32_0 = arith.constant 0 : i32
    %c0_i32_1 = arith.constant 0 : i32
    return %c0_i32, %c0_i32_0 : i32, i32
  }
  func.func @transform_1(%arg0: i32) -> (i32, i32) {
    %c0_i32 = arith.constant 0 : i32
    %c0_i32_0 = arith.constant 0 : i32
    %c0_i32_1 = arith.constant 0 : i32
    return %c0_i32, %c0_i32_0 : i32, i32
  }
  func.func @transform_2(%arg0: i32) -> (i32, i32, i32) {
    %c1_i32 = arith.constant 1 : i32
    %0 = arith.subi %arg0, %c1_i32 : i32
    %c0_i32 = arith.constant 0 : i32
    %1 = arith.maxsi %0, %c0_i32 : i32
    %c5_i32 = arith.constant 5 : i32
    %2 = arith.minsi %1, %c5_i32 : i32
    %c0_i32_0 = arith.constant 0 : i32
    %c0_i32_1 = arith.constant 0 : i32
    %c0_i32_2 = arith.constant 0 : i32
    return %2, %c0_i32_0, %c0_i32_1 : i32, i32, i32
  }
  func.func @transform_3(%arg0: i32) -> (i32, i32) {
    %c0_i32 = arith.constant 0 : i32
    %c0_i32_0 = arith.constant 0 : i32
    %c0_i32_1 = arith.constant 0 : i32
    return %c0_i32, %c0_i32_0 : i32, i32
  }
  func.func @transform_4(%arg0: i32) -> (i32, i32, i32) {
    %c0_i32 = arith.constant 0 : i32
    %c0_i32_0 = arith.constant 0 : i32
    %c0_i32_1 = arith.constant 0 : i32
    %c0_i32_2 = arith.constant 0 : i32
    return %c0_i32, %c0_i32_0, %c0_i32_1 : i32, i32, i32
  }
  func.func @transform_5(%arg0: i32) -> (i32, i32) {
    %c0_i32 = arith.constant 0 : i32
    %c0_i32_0 = arith.constant 0 : i32
    %c0_i32_1 = arith.constant 0 : i32
    return %c0_i32, %c0_i32_0 : i32, i32
  }
}

</mosaic_0001>

<llo_original>
// kernel: tpu_custom_call.1
$region0: #{tpu_custom_call.1}
  #allocation0 [shape = 'u32[]', space=smem, size = 0x4, offset = 0x4, fixed_abs, tag = 'smem constant byte address 0x4 - core index']
  #allocation1 [shape = 'u32[72,128]{1,0:T(1,128)}', space=vmem, size = 0x9000, scoped, tag = 'internal scratch']
  #allocation2 [shape = 'f32[8,512]{1,0:T(8,128)}', space=vmem, size = 0x4000, scoped, tag = 'scratch operand']
  %s0 = inlined_call_operand.hbm [shape: f32[8,32], index: 0, kind: input, shape index: {}]
  %s1 = inlined_call_operand.hbm [shape: bf16[32,512], index: 1, kind: input, shape index: {}]
  %s2 = inlined_call_operand.hbm [shape: bf16[6,512,512], index: 2, kind: input, shape index: {}]
  %s3 = inlined_call_operand.hbm [shape: bf16[512,128], index: 3, kind: input, shape index: {}]
  %s4 = inlined_call_operand.hbm [shape: f32[8,1,512], index: 4, kind: input, shape index: {}]
  %s5 = inlined_call_operand.hbm [shape: f32[8,128], index: 5, kind: output, shape index: {}]
  %s6 = sld [smem:[#allocation0]]
  $region85: #{tpu_custom_call.1} parent=0
    _
  %s8 = ssub.s32 1, %s6
  %s9 = scalar_select 0, %s8, %s6
  $region1: #{tpu_custom_call.1} parent=0
    #allocation3 [shape = 'u8[4096]{0}', space=vmem, size = 0x1000, scoped, tag = 'input window, operand 0, single buffered']
    #allocation4 [shape = 's32[2]{0}', space=sflag, size = 0x8, scoped, tag = 'scoped memory for tpu_custom_call.1']
    #allocation5 [shape = 's32[2]{0}', space=sflag, size = 0x8, scoped, tag = 'scoped memory for tpu_custom_call.1']
    #allocation6 [shape = 'u8[32768]{0}', space=vmem, size = 0x8000, scoped, tag = 'input window, operand 1, single buffered']
    #allocation7 [shape = 's32[1]{0}', space=sflag, size = 0x4, scoped, tag = 'scoped memory for tpu_custom_call.1']
    #allocation8 [shape = 'u8[1048576]{0}', space=vmem, size = 0x100000, scoped, tag = 'input window, operand 2']
    #allocation9 [shape = 'u8[131072]{0}', space=vmem, size = 0x20000, scoped, tag = 'input window, operand 3, single buffered']
    #allocation10 [shape = 'u8[16384]{0}', space=vmem, size = 0x4000, scoped, tag = 'input window, operand 4, single buffered']
    #allocation11 [shape = 's32[1]{0}', space=sflag, size = 0x4, scoped, tag = 'scoped memory for tpu_custom_call.1']
    #allocation12 [shape = 'u8[4096]{0}', space=vmem, size = 0x1000, scoped, tag = 'output window, operand 0, single buffered']
    %10 = vsyncpa [#allocation4], 0
    %11 = vsyncpa [#allocation7], 0
    %12 = vsyncpa [#allocation11], 0
    %13 = vsyncpa [#allocation5], 0
    loop: start=0, step=1, limit=10
    $region2: #{tpu_custom_call.1} parent=1 // loop_pre_header
      _
    $region3: #{tpu_custom_call.1} parent=1 // loop_header
      %s15 = sphi 0, %s19
      %p16 = scmp.ge.s32.totalorder %s15, 10
      %s23 = sphi 0, %s23
      %s25 = sphi 0, %s23
      %s26 = sphi 0, %s25
      %s40 = sphi 0, %s26
      %s44 = sphi 0, %s44
      %s46 = sphi 0, %s44
      %s47 = sphi 0, %s46
      %s61 = sphi 0, %s47
      %s77 = sphi 0, %s79
      %s80 = sphi 0, %s77
      %s81 = sphi 0, %s80
      %s97 = sphi 0, %s81
      %s101 = sphi 0, %s101
      %s103 = sphi 0, %s101
      %s104 = sphi 0, %s103
      %s118 = sphi 0, %s104
      %s122 = sphi 0, %s122
      %s124 = sphi 0, %s122
      %s125 = sphi 0, %s124
      %s139 = sphi 0, %s125
      %s143 = sphi 0, %s143
      %s145 = sphi 0, %s143
      %s146 = sphi 0, %s145
      %s160 = sphi 0, %s146
    $region4: #{tpu_custom_call.1} parent=1 // loop_header_branch
      %18 = sbr.rel (%p16) target = $region8
    $region5: #{tpu_custom_call.1} parent=1 // loop_body
      %s20 = ssub.s32 %s15, 1
      %s21 = ssub.s32 %s15, 2
      %s22 = sadd.s32 %s15, 1
      %s24 = sadd.s32 %s23, 1
      %p27 = scmp.eq.s32.totalorder %s15, 7
      %p28 = scmp.ne.s32.totalorder %s23, %s25
      %p29 = scmp.eq.s32.totalorder %s15, 0
      %p30 = por %p28, %p29
      %p31 = scmp.ne.s32.totalorder %s23, %s25
      %p32 = scmp.eq.s32.totalorder %s20, 7
      %p33 = por %p31, %p32
      %p34 = scmp.ne.s32.totalorder %s25, %s26
      %p35 = scmp.eq.s32.totalorder %s20, 0
      %p36 = por %p34, %p35
      %p37 = scmp.ne.s32.totalorder %s25, %s26
      %p38 = scmp.eq.s32.totalorder %s21, 7
      %p39 = por %p37, %p38
      %p41 = scmp.ne.s32.totalorder %s26, %s40
      %p42 = scmp.eq.s32.totalorder %s21, 0
      %p43 = por %p41, %p42
      %s45 = sadd.s32 %s44, 1
      %p48 = scmp.eq.s32.totalorder %s15, 7
      %p49 = scmp.ne.s32.totalorder %s44, %s46
      %p50 = scmp.eq.s32.totalorder %s15, 0
      %p51 = por %p49, %p50
      %p52 = scmp.ne.s32.totalorder %s44, %s46
      %p53 = scmp.eq.s32.totalorder %s20, 7
      %p54 = por %p52, %p53
      %p55 = scmp.ne.s32.totalorder %s46, %s47
      %p56 = scmp.eq.s32.totalorder %s20, 0
      %p57 = por %p55, %p56
      %p58 = scmp.ne.s32.totalorder %s46, %s47
      %p59 = scmp.eq.s32.totalorder %s21, 7
      %p60 = por %p58, %p59
      %p62 = scmp.ne.s32.totalorder %s47, %s61
      %p63 = scmp.eq.s32.totalorder %s21, 0
      %p64 = por %p62, %p63
      %s65 = ssub.s32 %s15, 1
      %p66 = scmp.gt.s32.totalorder %s65, 0
      %s67 = scalar_select %p66, %s65, 0
      %p68 = scmp.lt.s32.totalorder %s67, 5
      %s69 = scalar_select %p68, %s67, 5
      %s70 = ssub.s32 %s22, 1
      %p71 = scmp.gt.s32.totalorder %s70, 0
      %s72 = scalar_select %p71, %s70, 0
      %p73 = scmp.lt.s32.totalorder %s72, 5
      %s74 = scalar_select %p73, %s72, 5
      %s75 = ssub.s32 %s69, %s74
      %p76 = scmp.eq.s32.totalorder %s75, 0
      %s78 = sadd.s32 %s77, 1
      %s79 = scalar_select %p76, %s77, %s78
      %p82 = pneg %p76
      %p83 = scmp.eq.s32.totalorder %s15, 7
      %p84 = por %p82, %p83
      %p85 = scmp.ne.s32.totalorder %s77, %s80
      %p86 = scmp.eq.s32.totalorder %s15, 0
      %p87 = por %p85, %p86
      %p88 = scmp.ne.s32.totalorder %s77, %s80
      %p89 = scmp.eq.s32.totalorder %s20, 7
      %p90 = por %p88, %p89
      %p91 = scmp.ne.s32.totalorder %s80, %s81
      %p92 = scmp.eq.s32.totalorder %s20, 0
      %p93 = por %p91, %p92
      %p94 = scmp.ne.s32.totalorder %s80, %s81
      %p95 = scmp.eq.s32.totalorder %s21, 7
      %p96 = por %p94, %p95
      %p98 = scmp.ne.s32.totalorder %s81, %s97
      %p99 = scmp.eq.s32.totalorder %s21, 0
      %p100 = por %p98, %p99
      %s102 = sadd.s32 %s101, 1
      %p105 = scmp.eq.s32.totalorder %s15, 7
      %p106 = scmp.ne.s32.totalorder %s101, %s103
      %p107 = scmp.eq.s32.totalorder %s15, 0
      %p108 = por %p106, %p107
      %p109 = scmp.ne.s32.totalorder %s101, %s103
      %p110 = scmp.eq.s32.totalorder %s20, 7
      %p111 = por %p109, %p110
      %p112 = scmp.ne.s32.totalorder %s103, %s104
      %p113 = scmp.eq.s32.totalorder %s20, 0
      %p114 = por %p112, %p113
      %p115 = scmp.ne.s32.totalorder %s103, %s104
      %p116 = scmp.eq.s32.totalorder %s21, 7
      %p117 = por %p115, %p116
      %p119 = scmp.ne.s32.totalorder %s104, %s118
      %p120 = scmp.eq.s32.totalorder %s21, 0
      %p121 = por %p119, %p120
      %s123 = sadd.s32 %s122, 1
      %p126 = scmp.eq.s32.totalorder %s15, 7
      %p127 = scmp.ne.s32.totalorder %s122, %s124
      %p128 = scmp.eq.s32.totalorder %s15, 0
      %p129 = por %p127, %p128
      %p130 = scmp.ne.s32.totalorder %s122, %s124
      %p131 = scmp.eq.s32.totalorder %s20, 7
      %p132 = por %p130, %p131
      %p133 = scmp.ne.s32.totalorder %s124, %s125
      %p134 = scmp.eq.s32.totalorder %s20, 0
      %p135 = por %p133, %p134
      %p136 = scmp.ne.s32.totalorder %s124, %s125
      %p137 = scmp.eq.s32.totalorder %s21, 7
      %p138 = por %p136, %p137
      %p140 = scmp.ne.s32.totalorder %s125, %s139
      %p141 = scmp.eq.s32.totalorder %s21, 0
      %p142 = por %p140, %p141
      %s144 = sadd.s32 %s143, 1
      %p147 = scmp.eq.s32.totalorder %s15, 7
      %p148 = scmp.ne.s32.totalorder %s143, %s145
      %p149 = scmp.eq.s32.totalorder %s15, 0
      %p150 = por %p148, %p149
      %p151 = scmp.ne.s32.totalorder %s143, %s145
      %p152 = scmp.eq.s32.totalorder %s20, 7
      %p153 = por %p151, %p152
      %p154 = scmp.ne.s32.totalorder %s145, %s146
      %p155 = scmp.eq.s32.totalorder %s20, 0
      %p156 = por %p154, %p155
      %p157 = scmp.ne.s32.totalorder %s145, %s146
      %p158 = scmp.eq.s32.totalorder %s21, 7
      %p159 = por %p157, %p158
      %p161 = scmp.ne.s32.totalorder %s146, %s160
      %p162 = scmp.eq.s32.totalorder %s21, 0
      %p163 = por %p161, %p162
      %p164 = scmp.le.s32.totalorder 1, %s15
      %p165 = scmp.lt.s32.totalorder %s15, 9
      %p166 = pnand %p164, %p165
      %p167 = pneg %p166
      // Predicated region
      $region9: #{tpu_custom_call.1} parent=5 // pred_check
        _
      $region10: #{tpu_custom_call.1} parent=5 // pred_check_branch
        %169 = sbr.rel (%p166) target = $region12
      $region11: #{tpu_custom_call.1} parent=5 // pred_region
        %s170 = ssub.s32 %s15, 1
        // Predicated region
        $region13: #{tpu_custom_call.1} parent=11 // pred_check
          %p171 = pneg %p36
        $region14: #{tpu_custom_call.1} parent=11 // pred_check_branch
          %173 = sbr.rel (%p171) target = $region16
        $region15: #{tpu_custom_call.1} parent=11 // pred_region
          %175 = vsyncadd [#allocation4], 0
          %s177 = sshll.u32 %s0, 4
          %s178 = int_to_ptr.hbm [resolvable:$true] %s177
          %s179 = sshll.u32 [#allocation3], 4
          %s180 = int_to_ptr.vmem [resolvable:$true] %s179
          %182 = dma.hbm_to_vmem [thread:$0]  %s178, 128, %s180, [#allocation4]
        $region16: #{tpu_custom_call.1} parent=11 // pred_fallthru
          _
        // Predicated region
        $region17: #{tpu_custom_call.1} parent=11 // pred_check
          %p183 = pneg %p57
        $region18: #{tpu_custom_call.1} parent=11 // pred_check_branch
          %185 = sbr.rel (%p183) target = $region20
        $region19: #{tpu_custom_call.1} parent=11 // pred_region
          %187 = vsyncadd [#allocation7], 0
          %s188 = sshll.u32 %s1, 4
          %s189 = int_to_ptr.hbm [resolvable:$true] %s188
          %s190 = sshll.u32 [#allocation6], 4
          %s191 = int_to_ptr.vmem [resolvable:$true] %s190
          %196 = dma.hbm_to_vmem [thread:$0]  %s189, 1024, %s191, [#allocation7], 256, 256, 16
        $region20: #{tpu_custom_call.1} parent=11 // pred_fallthru
          _
        // Predicated region
        $region21: #{tpu_custom_call.1} parent=11 // pred_check
          %p197 = pneg %p114
        $region22: #{tpu_custom_call.1} parent=11 // pred_check_branch
          %199 = sbr.rel (%p197) target = $region24
        $region23: #{tpu_custom_call.1} parent=11 // pred_region
          %201 = vsyncadd [#allocation7], 0
          %s202 = sshll.u32 %s3, 4
          %s203 = int_to_ptr.hbm [resolvable:$true] %s202
          %s204 = sshll.u32 [#allocation9], 4
          %s205 = int_to_ptr.vmem [resolvable:$true] %s204
          %210 = dma.hbm_to_vmem [thread:$0]  %s203, 4096, %s205, [#allocation7], 64, 64, 4
        $region24: #{tpu_custom_call.1} parent=11 // pred_fallthru
          _
        // Predicated region
        $region25: #{tpu_custom_call.1} parent=11 // pred_check
          %p211 = pneg %p135
        $region26: #{tpu_custom_call.1} parent=11 // pred_check_branch
          %213 = sbr.rel (%p211) target = $region28
        $region27: #{tpu_custom_call.1} parent=11 // pred_region
          %215 = vsyncadd [#allocation11], 0
          %s216 = sshll.u32 %s4, 4
          %s217 = int_to_ptr.hbm [resolvable:$true] %s216
          %s218 = sshll.u32 [#allocation10], 4
          %s219 = int_to_ptr.vmem [resolvable:$true] %s218
          %224 = dma.hbm_to_vmem [thread:$0]  %s217, 512, %s219, [#allocation11], 64, 64, 4
        $region28: #{tpu_custom_call.1} parent=11 // pred_fallthru
          _
      $region12: #{tpu_custom_call.1} parent=5 // pred_fallthru
        _
      %p225 = scmp.lt.s32.totalorder %s15, 8
      // Predicated region
      $region29: #{tpu_custom_call.1} parent=5 // pred_check
        %p226 = pneg %p225
      $region30: #{tpu_custom_call.1} parent=5 // pred_check_branch
        %228 = sbr.rel (%p226) target = $region32
      $region31: #{tpu_custom_call.1} parent=5 // pred_region
        // Predicated region
        $region33: #{tpu_custom_call.1} parent=31 // pred_check
          %p229 = pneg %p87
        $region34: #{tpu_custom_call.1} parent=31 // pred_check_branch
          %231 = sbr.rel (%p229) target = $region36
        $region35: #{tpu_custom_call.1} parent=31 // pred_region
          %s232 = sand.u32 %s15, 1
          %s233 = scalar_lea.sflag [#allocation4], %s232
          %s234 = sand.u32 %s77, 1
          %s235 = smul.addr %s234, 1024
          %s236 = scalar_lea.vmem [#allocation8], %s235
          %s237 = ssub.s32 %s15, 1
          %p238 = scmp.gt.s32.totalorder %s237, 0
          %s239 = scalar_select %p238, %s237, 0
          %p240 = scmp.lt.s32.totalorder %s239, 5
          %s241 = scalar_select %p240, %s239, 5
          %243 = vsyncadd %s233, 0
          %s244 = smul.addr %s241, 256
          %s245 = smul.addr %s244, 4
          %s246 = scalar_lea.hbm %s2, %s245
          %s247 = sshll.u32 %s246, 4
          %s248 = int_to_ptr.hbm [resolvable:$true] %s247
          %s249 = sshll.u32 %s236, 4
          %s250 = int_to_ptr.vmem [resolvable:$true] %s249
          %255 = dma.hbm_to_vmem [thread:$0]  %s248, 16384, %s250, %s233, 256, 256, 16
        $region36: #{tpu_custom_call.1} parent=31 // pred_fallthru
          _
      $region32: #{tpu_custom_call.1} parent=5 // pred_fallthru
        _
      %p256 = scmp.le.s32.totalorder 1, %s15
      %p257 = scmp.lt.s32.totalorder %s15, 9
      %p258 = pnand %p256, %p257
      %p259 = pneg %p258
      // Predicated region
      $region37: #{tpu_custom_call.1} parent=5 // pred_check
        _
      $region38: #{tpu_custom_call.1} parent=5 // pred_check_branch
        %261 = sbr.rel (%p258) target = $region40
      $region39: #{tpu_custom_call.1} parent=5 // pred_region
        %s262 = ssub.s32 %s15, 1
        // Predicated region
        $region41: #{tpu_custom_call.1} parent=39 // pred_check
          %p263 = pneg %p36
        $region42: #{tpu_custom_call.1} parent=39 // pred_check_branch
          %265 = sbr.rel (%p263) target = $region44
        $region43: #{tpu_custom_call.1} parent=39 // pred_region
          %267 = dma.done [#allocation4], 128
        $region44: #{tpu_custom_call.1} parent=39 // pred_fallthru
          _
        // Predicated region
        $region45: #{tpu_custom_call.1} parent=39 // pred_check
          %p268 = pneg %p57
        $region46: #{tpu_custom_call.1} parent=39 // pred_check_branch
          %270 = sbr.rel (%p268) target = $region48
        $region47: #{tpu_custom_call.1} parent=39 // pred_region
          %272 = dma.done [#allocation7], 1024
        $region48: #{tpu_custom_call.1} parent=39 // pred_fallthru
          _
        %s273 = sand.u32 %s20, 1
        %s274 = scalar_lea.sflag [#allocation4], %s273
        %s275 = sand.u32 %s80, 1
        %s276 = smul.addr %s275, 1024
        %s277 = scalar_lea.vmem [#allocation8], %s276
        // Predicated region
        $region49: #{tpu_custom_call.1} parent=39 // pred_check
          %p278 = pneg %p93
        $region50: #{tpu_custom_call.1} parent=39 // pred_check_branch
          %280 = sbr.rel (%p278) target = $region52
        $region51: #{tpu_custom_call.1} parent=39 // pred_region
          %282 = dma.done %s274, 16384
        $region52: #{tpu_custom_call.1} parent=39 // pred_fallthru
          _
        // Predicated region
        $region53: #{tpu_custom_call.1} parent=39 // pred_check
          %p283 = pneg %p114
        $region54: #{tpu_custom_call.1} parent=39 // pred_check_branch
          %285 = sbr.rel (%p283) target = $region56
        $region55: #{tpu_custom_call.1} parent=39 // pred_region
          %287 = dma.done [#allocation7], 4096
        $region56: #{tpu_custom_call.1} parent=39 // pred_fallthru
          _
        // Predicated region
        $region57: #{tpu_custom_call.1} parent=39 // pred_check
          %p288 = pneg %p135
        $region58: #{tpu_custom_call.1} parent=39 // pred_check_branch
          %290 = sbr.rel (%p288) target = $region60
        $region59: #{tpu_custom_call.1} parent=39 // pred_region
          %292 = dma.done [#allocation11], 512
        $region60: #{tpu_custom_call.1} parent=39 // pred_fallthru
          _
        %p293 = pneg %p36
        %p294 = pneg %p33
        %p295 = pneg %p57
        %p296 = pneg %p54
        %s297 = sand.u32 %s20, 1
        %s298 = scalar_lea.sflag [#allocation4], %s297
        %s299 = sand.u32 %s80, 1
        %s300 = smul.addr %s299, 1024
        %s301 = scalar_lea.vmem [#allocation8], %s300
        %p302 = pneg %p93
        %p303 = pneg %p90
        %p304 = pneg %p114
        %p305 = pneg %p111
        %p306 = pneg %p135
        %p307 = pneg %p132
        %p308 = pneg %p156
        %p309 = pneg %p153
        %s310 = ssub.s32 %s20, 1
        %p311 = scmp.gt.s32.totalorder %s310, 0
        %s312 = scalar_select %p311, %s310, 0
        %p313 = scmp.lt.s32.totalorder %s312, 5
        %s314 = scalar_select %p313, %s312, 5
        %p316 = scmp.eq.s32.totalorder %s20, 0
        // Predicated region
        $region61: #{tpu_custom_call.1} parent=39 // pred_check
          %p317 = pneg %p316
        $region62: #{tpu_custom_call.1} parent=39 // pred_check_branch
          %319 = sbr.rel (%p317) target = $region64
        $region63: #{tpu_custom_call.1} parent=39 // pred_region
          %v320 = vld [vmem:[#allocation3] sm:$0xff]
          %v321 = vpack.c.bf16 %v320, %v320
          %v322 = vld [vmem:[#allocation6] sm:$0xff]
          %v323 = vld [vmem:[#allocation6 + $0x8] sm:$0xff]
          %v324 = vld [vmem:[#allocation6 + $0x10] sm:$0xff]
          %v325 = vld [vmem:[#allocation6 + $0x18] sm:$0xff]
          %v326 = vld [vmem:[#allocation6 + $0x20] sm:$0xff]
          %v327 = vld [vmem:[#allocation6 + $0x28] sm:$0xff]
          %v328 = vld [vmem:[#allocation6 + $0x30] sm:$0xff]
          %v329 = vld [vmem:[#allocation6 + $0x38] sm:$0xff]
          %v330 = vld [vmem:[#allocation10] sm:$0xf]
          %v332 = vperm.slane %v330, 0
          %v333 = vperm.slane %v330, 1
          %v334 = vperm.slane %v330, 2
          %v335 = vperm.slane %v330, 3
          %v348 = vunpack.c.l.b16 %v322
          %v349 = vunpack.c.h.b16 %v322
          %v350 = vunpack.c.l.b16 %v323
          %v351 = vunpack.c.h.b16 %v323
          %v352 = vunpack.c.l.b16 %v324
          %v353 = vunpack.c.h.b16 %v324
          %v354 = vunpack.c.l.b16 %v325
          %v355 = vunpack.c.h.b16 %v325
          %v356 = vunpack.c.l.b16 %v326
          %v357 = vunpack.c.h.b16 %v326
          %v358 = vunpack.c.l.b16 %v327
          %v359 = vunpack.c.h.b16 %v327
          %v360 = vunpack.c.l.b16 %v328
          %v361 = vunpack.c.h.b16 %v328
          %v362 = vunpack.c.l.b16 %v329
          %v363 = vunpack.c.h.b16 %v329
          %v364 = vpack.c.b16 %v352, %v348
          %v365 = vpack.c.b16 %v353, %v349
          %v366 = vpack.c.b16 %v354, %v350
          %v367 = vpack.c.b16 %v355, %v351
          %v368 = vpack.c.b16 %v360, %v356
          %v369 = vpack.c.b16 %v361, %v357
          %v370 = vpack.c.b16 %v362, %v358
          %v371 = vpack.c.b16 %v363, %v359
          %vm380 = vcmask 261120
          %v382 = vsel %vm380, %v321, 0
          %384 = vmatpush.bf16.msra.mxu0 0
          %385 = vmatpush.bf16.msra.mxu0 0
          %386 = vmatpush.bf16.msra.mxu0 0
          %387 = vmatpush.bf16.msra.mxu0 0
          %388 = vmatpush.bf16.msra.mxu0 0
          %389 = vmatpush.bf16.msra.mxu0 0
          %390 = vmatpush.bf16.msra.mxu0 %v368
          %391 = vmatpush.bf16.msra.mxu0 %v364
          %392 = vmatmul.bf16.gmra.mxu0 %v382
          %v393 = vpop.f32.mrf.mxu0
          %v394 = vadd.f32 %v332, %v393
          %v395 = vpop.f32.mrf.mxu0
          %396 = vdwg.mxu0
          %397 = vmatpush.bf16.msra.mxu0 0
          %398 = vmatpush.bf16.msra.mxu0 0
          %399 = vmatpush.bf16.msra.mxu0 0
          %400 = vmatpush.bf16.msra.mxu0 0
          %401 = vmatpush.bf16.msra.mxu0 0
          %402 = vmatpush.bf16.msra.mxu0 0
          %403 = vmatpush.bf16.msra.mxu0 %v369
          %404 = vmatpush.bf16.msra.mxu0 %v365
          %405 = vmatmul.bf16.gmra.mxu0 %v382
          %v406 = vpop.f32.mrf.mxu0
          %v407 = vadd.f32 %v333, %v406
          %v408 = vpop.f32.mrf.mxu0
          %409 = vdwg.mxu0
          %410 = vmatpush.bf16.msra.mxu0 0
          %411 = vmatpush.bf16.msra.mxu0 0
          %412 = vmatpush.bf16.msra.mxu0 0
          %413 = vmatpush.bf16.msra.mxu0 0
          %414 = vmatpush.bf16.msra.mxu0 0
          %415 = vmatpush.bf16.msra.mxu0 0
          %416 = vmatpush.bf16.msra.mxu0 %v370
          %417 = vmatpush.bf16.msra.mxu0 %v366
          %418 = vmatmul.bf16.gmra.mxu0 %v382
          %v419 = vpop.f32.mrf.mxu0
          %v420 = vadd.f32 %v334, %v419
          %v421 = vpop.f32.mrf.mxu0
          %422 = vdwg.mxu0
          %423 = vmatpush.bf16.msra.mxu0 0
          %424 = vmatpush.bf16.msra.mxu0 0
          %425 = vmatpush.bf16.msra.mxu0 0
          %426 = vmatpush.bf16.msra.mxu0 0
          %427 = vmatpush.bf16.msra.mxu0 0
          %428 = vmatpush.bf16.msra.mxu0 0
          %429 = vmatpush.bf16.msra.mxu0 %v371
          %430 = vmatpush.bf16.msra.mxu0 %v367
          %431 = vmatmul.bf16.gmra.mxu0 %v382
          %v432 = vpop.f32.mrf.mxu0
          %v433 = vadd.f32 %v335, %v432
          %v434 = vpop.f32.mrf.mxu0
          %435 = vdwg.mxu0
          %v436 = vmax.f32 %v394, 0.0
          %v437 = vmax.f32 %v407, 0.0
          %v438 = vmax.f32 %v420, 0.0
          %v439 = vmax.f32 %v433, 0.0
          %440 = vst [vmem:[#allocation2] sm:$0xff] %v436
          %441 = vst [vmem:[#allocation2 + $0x8] sm:$0xff] %v437
          %442 = vst [vmem:[#allocation2 + $0x10] sm:$0xff] %v438
          %443 = vst [vmem:[#allocation2 + $0x18] sm:$0xff] %v439
        $region64: #{tpu_custom_call.1} parent=39 // pred_fallthru
          _
        %p444 = scmp.ge.s32.totalorder %s20, 1
        %p445 = scmp.lt.s32.totalorder %s20, 7
        %p446 = pnand %p444, %p445
        %p447 = pneg %p446
        // Predicated region
        $region65: #{tpu_custom_call.1} parent=39 // pred_check
          _
        $region66: #{tpu_custom_call.1} parent=39 // pred_check_branch
          %449 = sbr.rel (%p446) target = $region68
        $region67: #{tpu_custom_call.1} parent=39 // pred_region
          %v450 = vld [vmem:[#allocation2] sm:$0xff]
          %v451 = vld [vmem:[#allocation2 + $0x8] sm:$0xff]
          %v452 = vld [vmem:[#allocation2 + $0x10] sm:$0xff]
          %v453 = vld [vmem:[#allocation2 + $0x18] sm:$0xff]
          %v454 = vpack.c.bf16 %v450, %v450
          %v455 = vpack.c.bf16 %v451, %v451
          %v456 = vpack.c.bf16 %v452, %v452
          %v457 = vpack.c.bf16 %v453, %v453
          %v458 = vld [vmem:[%s277] sm:$0xff]
          %v459 = vld [vmem:[%s277 + $0x8] sm:$0xff]
          %v460 = vld [vmem:[%s277 + $0x10] sm:$0xff]
          %v461 = vld [vmem:[%s277 + $0x18] sm:$0xff]
          %v462 = vld [vmem:[%s277 + $0x20] sm:$0xff]
          %v463 = vld [vmem:[%s277 + $0x28] sm:$0xff]
          %v464 = vld [vmem:[%s277 + $0x30] sm:$0xff]
          %v465 = vld [vmem:[%s277 + $0x38] sm:$0xff]
          %v466 = vld [vmem:[%s277 + $0x40] sm:$0xff]
          %v467 = vld [vmem:[%s277 + $0x48] sm:$0xff]
          %v468 = vld [vmem:[%s277 + $0x50] sm:$0xff]
          %v469 = vld [vmem:[%s277 + $0x58] sm:$0xff]
          %v470 = vld [vmem:[%s277 + $0x60] sm:$0xff]
          %v471 = vld [vmem:[%s277 + $0x68] sm:$0xff]
          %v472 = vld [vmem:[%s277 + $0x70] sm:$0xff]
          %v473 = vld [vmem:[%s277 + $0x78] sm:$0xff]
          %v474 = vld [vmem:[%s277 + $0x80] sm:$0xff]
          %v475 = vld [vmem:[%s277 + $0x88] sm:$0xff]
          %v476 = vld [vmem:[%s277 + $0x90] sm:$0xff]
          %v477 = vld [vmem:[%s277 + $0x98] sm:$0xff]
          %v478 = vld [vmem:[%s277 + $0xa0] sm:$0xff]
          %v479 = vld [vmem:[%s277 + $0xa8] sm:$0xff]
          %v480 = vld [vmem:[%s277 + $0xb0] sm:$0xff]
          %v481 = vld [vmem:[%s277 + $0xb8] sm:$0xff]
          %v482 = vld [vmem:[%s277 + $0xc0] sm:$0xff]
          %v483 = vld [vmem:[%s277 + $0xc8] sm:$0xff]
          %v484 = vld [vmem:[%s277 + $0xd0] sm:$0xff]
          %v485 = vld [vmem:[%s277 + $0xd8] sm:$0xff]
          %v486 = vld [vmem:[%s277 + $0xe0] sm:$0xff]
          %v487 = vld [vmem:[%s277 + $0xe8] sm:$0xff]
          %v488 = vld [vmem:[%s277 + $0xf0] sm:$0xff]
          %v489 = vld [vmem:[%s277 + $0xf8] sm:$0xff]
          %v490 = vld [vmem:[%s277 + $0x100] sm:$0xff]
          %v491 = vld [vmem:[%s277 + $0x108] sm:$0xff]
          %v492 = vld [vmem:[%s277 + $0x110] sm:$0xff]
          %v493 = vld [vmem:[%s277 + $0x118] sm:$0xff]
          %v494 = vld [vmem:[%s277 + $0x120] sm:$0xff]
          %v495 = vld [vmem:[%s277 + $0x128] sm:$0xff]
          %v496 = vld [vmem:[%s277 + $0x130] sm:$0xff]
          %v497 = vld [vmem:[%s277 + $0x138] sm:$0xff]
          %v498 = vld [vmem:[%s277 + $0x140] sm:$0xff]
          %v499 = vld [vmem:[%s277 + $0x148] sm:$0xff]
          %v500 = vld [vmem:[%s277 + $0x150] sm:$0xff]
          %v501 = vld [vmem:[%s277 + $0x158] sm:$0xff]
          %v502 = vld [vmem:[%s277 + $0x160] sm:$0xff]
          %v503 = vld [vmem:[%s277 + $0x168] sm:$0xff]
          %v504 = vld [vmem:[%s277 + $0x170] sm:$0xff]
          %v505 = vld [vmem:[%s277 + $0x178] sm:$0xff]
          %v506 = vld [vmem:[%s277 + $0x180] sm:$0xff]
          %v507 = vld [vmem:[%s277 + $0x188] sm:$0xff]
          %v508 = vld [vmem:[%s277 + $0x190] sm:$0xff]
          %v509 = vld [vmem:[%s277 + $0x198] sm:$0xff]
          %v510 = vld [vmem:[%s277 + $0x1a0] sm:$0xff]
          %v511 = vld [vmem:[%s277 + $0x1a8] sm:$0xff]
          %v512 = vld [vmem:[%s277 + $0x1b0] sm:$0xff]
          %v513 = vld [vmem:[%s277 + $0x1b8] sm:$0xff]
          %v514 = vld [vmem:[%s277 + $0x1c0] sm:$0xff]
          %v515 = vld [vmem:[%s277 + $0x1c8] sm:$0xff]
          %v516 = vld [vmem:[%s277 + $0x1d0] sm:$0xff]
          %v517 = vld [vmem:[%s277 + $0x1d8] sm:$0xff]
          %v518 = vld [vmem:[%s277 + $0x1e0] sm:$0xff]
          %v519 = vld [vmem:[%s277 + $0x1e8] sm:$0xff]
          %v520 = vld [vmem:[%s277 + $0x1f0] sm:$0xff]
          %v521 = vld [vmem:[%s277 + $0x1f8] sm:$0xff]
          %v522 = vld [vmem:[%s277 + $0x200] sm:$0xff]
          %v523 = vld [vmem:[%s277 + $0x208] sm:$0xff]
          %v524 = vld [vmem:[%s277 + $0x210] sm:$0xff]
          %v525 = vld [vmem:[%s277 + $0x218] sm:$0xff]
          %v526 = vld [vmem:[%s277 + $0x220] sm:$0xff]
          %v527 = vld [vmem:[%s277 + $0x228] sm:$0xff]
          %v528 = vld [vmem:[%s277 + $0x230] sm:$0xff]
          %v529 = vld [vmem:[%s277 + $0x238] sm:$0xff]
          %v530 = vld [vmem:[%s277 + $0x240] sm:$0xff]
          %v531 = vld [vmem:[%s277 + $0x248] sm:$0xff]
          %v532 = vld [vmem:[%s277 + $0x250] sm:$0xff]
          %v533 = vld [vmem:[%s277 + $0x258] sm:$0xff]
          %v534 = vld [vmem:[%s277 + $0x260] sm:$0xff]
          %v535 = vld [vmem:[%s277 + $0x268] sm:$0xff]
          %v536 = vld [vmem:[%s277 + $0x270] sm:$0xff]
          %v537 = vld [vmem:[%s277 + $0x278] sm:$0xff]
          %v538 = vld [vmem:[%s277 + $0x280] sm:$0xff]
          %v539 = vld [vmem:[%s277 + $0x288] sm:$0xff]
          %v540 = vld [vmem:[%s277 + $0x290] sm:$0xff]
          %v541 = vld [vmem:[%s277 + $0x298] sm:$0xff]
          %v542 = vld [vmem:[%s277 + $0x2a0] sm:$0xff]
          %v543 = vld [vmem:[%s277 + $0x2a8] sm:$0xff]
          %v544 = vld [vmem:[%s277 + $0x2b0] sm:$0xff]
          %v545 = vld [vmem:[%s277 + $0x2b8] sm:$0xff]
          %v546 = vld [vmem:[%s277 + $0x2c0] sm:$0xff]
          %v547 = vld [vmem:[%s277 + $0x2c8] sm:$0xff]
          %v548 = vld [vmem:[%s277 + $0x2d0] sm:$0xff]
          %v549 = vld [vmem:[%s277 + $0x2d8] sm:$0xff]
          %v550 = vld [vmem:[%s277 + $0x2e0] sm:$0xff]
          %v551 = vld [vmem:[%s277 + $0x2e8] sm:$0xff]
          %v552 = vld [vmem:[%s277 + $0x2f0] sm:$0xff]
          %v553 = vld [vmem:[%s277 + $0x2f8] sm:$0xff]
          %v554 = vld [vmem:[%s277 + $0x300] sm:$0xff]
          %v555 = vld [vmem:[%s277 + $0x308] sm:$0xff]
          %v556 = vld [vmem:[%s277 + $0x310] sm:$0xff]
          %v557 = vld [vmem:[%s277 + $0x318] sm:$0xff]
          %v558 = vld [vmem:[%s277 + $0x320] sm:$0xff]
          %v559 = vld [vmem:[%s277 + $0x328] sm:$0xff]
          %v560 = vld [vmem:[%s277 + $0x330] sm:$0xff]
          %v561 = vld [vmem:[%s277 + $0x338] sm:$0xff]
          %v562 = vld [vmem:[%s277 + $0x340] sm:$0xff]
          %v563 = vld [vmem:[%s277 + $0x348] sm:$0xff]
          %v564 = vld [vmem:[%s277 + $0x350] sm:$0xff]
          %v565 = vld [vmem:[%s277 + $0x358] sm:$0xff]
          %v566 = vld [vmem:[%s277 + $0x360] sm:$0xff]
          %v567 = vld [vmem:[%s277 + $0x368] sm:$0xff]
          %v568 = vld [vmem:[%s277 + $0x370] sm:$0xff]
          %v569 = vld [vmem:[%s277 + $0x378] sm:$0xff]
          %v570 = vld [vmem:[%s277 + $0x380] sm:$0xff]
          %v571 = vld [vmem:[%s277 + $0x388] sm:$0xff]
          %v572 = vld [vmem:[%s277 + $0x390] sm:$0xff]
          %v573 = vld [vmem:[%s277 + $0x398] sm:$0xff]
          %v574 = vld [vmem:[%s277 + $0x3a0] sm:$0xff]
          %v575 = vld [vmem:[%s277 + $0x3a8] sm:$0xff]
          %v576 = vld [vmem:[%s277 + $0x3b0] sm:$0xff]
          %v577 = vld [vmem:[%s277 + $0x3b8] sm:$0xff]
          %v578 = vld [vmem:[%s277 + $0x3c0] sm:$0xff]
          %v579 = vld [vmem:[%s277 + $0x3c8] sm:$0xff]
          %v580 = vld [vmem:[%s277 + $0x3d0] sm:$0xff]
          %v581 = vld [vmem:[%s277 + $0x3d8] sm:$0xff]
          %v582 = vld [vmem:[%s277 + $0x3e0] sm:$0xff]
          %v583 = vld [vmem:[%s277 + $0x3e8] sm:$0xff]
          %v584 = vld [vmem:[%s277 + $0x3f0] sm:$0xff]
          %v585 = vld [vmem:[%s277 + $0x3f8] sm:$0xff]
          %s586 = smul.u32 %s20, 4
          %s587 = scalar_lea.vmem [#allocation10], %s586
          %v588 = vld [vmem:[%s587] sm:$0xf]
          %v590 = vperm.slane %v588, 0
          %v591 = vperm.slane %v588, 1
          %v592 = vperm.slane %v588, 2
          %v593 = vperm.slane %v588, 3
          %v726 = vunpack.c.l.b16 %v458
          %v727 = vunpack.c.h.b16 %v458
          %v728 = vunpack.c.l.b16 %v459
          %v729 = vunpack.c.h.b16 %v459
          %v730 = vunpack.c.l.b16 %v460
          %v731 = vunpack.c.h.b16 %v460
          %v732 = vunpack.c.l.b16 %v461
          %v733 = vunpack.c.h.b16 %v461
          %v734 = vunpack.c.l.b16 %v462
          %v735 = vunpack.c.h.b16 %v462
          %v736 = vunpack.c.l.b16 %v463
          %v737 = vunpack.c.h.b16 %v463
          %v738 = vunpack.c.l.b16 %v464
          %v739 = vunpack.c.h.b16 %v464
          %v740 = vunpack.c.l.b16 %v465
          %v741 = vunpack.c.h.b16 %v465
          %v742 = vunpack.c.l.b16 %v466
          %v743 = vunpack.c.h.b16 %v466
          %v744 = vunpack.c.l.b16 %v467
          %v745 = vunpack.c.h.b16 %v467
          %v746 = vunpack.c.l.b16 %v468
          %v747 = vunpack.c.h.b16 %v468
          %v748 = vunpack.c.l.b16 %v469
          %v749 = vunpack.c.h.b16 %v469
          %v750 = vunpack.c.l.b16 %v470
          %v751 = vunpack.c.h.b16 %v470
          %v752 = vunpack.c.l.b16 %v471
          %v753 = vunpack.c.h.b16 %v471
          %v754 = vunpack.c.l.b16 %v472
          %v755 = vunpack.c.h.b16 %v472
          %v756 = vunpack.c.l.b16 %v473
          %v757 = vunpack.c.h.b16 %v473
          %v758 = vunpack.c.l.b16 %v474
          %v759 = vunpack.c.h.b16 %v474
          %v760 = vunpack.c.l.b16 %v475
          %v761 = vunpack.c.h.b16 %v475
          %v762 = vunpack.c.l.b16 %v476
          %v763 = vunpack.c.h.b16 %v476
          %v764 = vunpack.c.l.b16 %v477
          %v765 = vunpack.c.h.b16 %v477
          %v766 = vunpack.c.l.b16 %v478
          %v767 = vunpack.c.h.b16 %v478
          %v768 = vunpack.c.l.b16 %v479
          %v769 = vunpack.c.h.b16 %v479
          %v770 = vunpack.c.l.b16 %v480
          %v771 = vunpack.c.h.b16 %v480
          %v772 = vunpack.c.l.b16 %v481
          %v773 = vunpack.c.h.b16 %v481
          %v774 = vunpack.c.l.b16 %v482
          %v775 = vunpack.c.h.b16 %v482
          %v776 = vunpack.c.l.b16 %v483
          %v777 = vunpack.c.h.b16 %v483
          %v778 = vunpack.c.l.b16 %v484
          %v779 = vunpack.c.h.b16 %v484
          %v780 = vunpack.c.l.b16 %v485
          %v781 = vunpack.c.h.b16 %v485
          %v782 = vunpack.c.l.b16 %v486
          %v783 = vunpack.c.h.b16 %v486
          %v784 = vunpack.c.l.b16 %v487
          %v785 = vunpack.c.h.b16 %v487
          %v786 = vunpack.c.l.b16 %v488
          %v787 = vunpack.c.h.b16 %v488
          %v788 = vunpack.c.l.b16 %v489
          %v789 = vunpack.c.h.b16 %v489
          %v790 = vunpack.c.l.b16 %v490
          %v791 = vunpack.c.h.b16 %v490
          %v792 = vunpack.c.l.b16 %v491
          %v793 = vunpack.c.h.b16 %v491
          %v794 = vunpack.c.l.b16 %v492
          %v795 = vunpack.c.h.b16 %v492
          %v796 = vunpack.c.l.b16 %v493
          %v797 = vunpack.c.h.b16 %v493
          %v798 = vunpack.c.l.b16 %v494
          %v799 = vunpack.c.h.b16 %v494
          %v800 = vunpack.c.l.b16 %v495
          %v801 = vunpack.c.h.b16 %v495
          %v802 = vunpack.c.l.b16 %v496
          %v803 = vunpack.c.h.b16 %v496
          %v804 = vunpack.c.l.b16 %v497
          %v805 = vunpack.c.h.b16 %v497
          %v806 = vunpack.c.l.b16 %v498
          %v807 = vunpack.c.h.b16 %v498
          %v808 = vunpack.c.l.b16 %v499
          %v809 = vunpack.c.h.b16 %v499
          %v810 = vunpack.c.l.b16 %v500
          %v811 = vunpack.c.h.b16 %v500
          %v812 = vunpack.c.l.b16 %v501
          %v813 = vunpack.c.h.b16 %v501
          %v814 = vunpack.c.l.b16 %v502
          %v815 = vunpack.c.h.b16 %v502
          %v816 = vunpack.c.l.b16 %v503
          %v817 = vunpack.c.h.b16 %v503
          %v818 = vunpack.c.l.b16 %v504
          %v819 = vunpack.c.h.b16 %v504
          %v820 = vunpack.c.l.b16 %v505
          %v821 = vunpack.c.h.b16 %v505
          %v822 = vunpack.c.l.b16 %v506
          %v823 = vunpack.c.h.b16 %v506
          %v824 = vunpack.c.l.b16 %v507
          %v825 = vunpack.c.h.b16 %v507
          %v826 = vunpack.c.l.b16 %v508
          %v827 = vunpack.c.h.b16 %v508
          %v828 = vunpack.c.l.b16 %v509
          %v829 = vunpack.c.h.b16 %v509
          %v830 = vunpack.c.l.b16 %v510
          %v831 = vunpack.c.h.b16 %v510
          %v832 = vunpack.c.l.b16 %v511
          %v833 = vunpack.c.h.b16 %v511
          %v834 = vunpack.c.l.b16 %v512
          %v835 = vunpack.c.h.b16 %v512
          %v836 = vunpack.c.l.b16 %v513
          %v837 = vunpack.c.h.b16 %v513
          %v838 = vunpack.c.l.b16 %v514
          %v839 = vunpack.c.h.b16 %v514
          %v840 = vunpack.c.l.b16 %v515
          %v841 = vunpack.c.h.b16 %v515
          %v842 = vunpack.c.l.b16 %v516
          %v843 = vunpack.c.h.b16 %v516
          %v844 = vunpack.c.l.b16 %v517
          %v845 = vunpack.c.h.b16 %v517
          %v846 = vunpack.c.l.b16 %v518
          %v847 = vunpack.c.h.b16 %v518
          %v848 = vunpack.c.l.b16 %v519
          %v849 = vunpack.c.h.b16 %v519
          %v850 = vunpack.c.l.b16 %v520
          %v851 = vunpack.c.h.b16 %v520
          %v852 = vunpack.c.l.b16 %v521
          %v853 = vunpack.c.h.b16 %v521
          %v854 = vunpack.c.l.b16 %v522
          %v855 = vunpack.c.h.b16 %v522
          %v856 = vunpack.c.l.b16 %v523
          %v857 = vunpack.c.h.b16 %v523
          %v858 = vunpack.c.l.b16 %v524
          %v859 = vunpack.c.h.b16 %v524
          %v860 = vunpack.c.l.b16 %v525
          %v861 = vunpack.c.h.b16 %v525
          %v862 = vunpack.c.l.b16 %v526
          %v863 = vunpack.c.h.b16 %v526
          %v864 = vunpack.c.l.b16 %v527
          %v865 = vunpack.c.h.b16 %v527
          %v866 = vunpack.c.l.b16 %v528
          %v867 = vunpack.c.h.b16 %v528
          %v868 = vunpack.c.l.b16 %v529
          %v869 = vunpack.c.h.b16 %v529
          %v870 = vunpack.c.l.b16 %v530
          %v871 = vunpack.c.h.b16 %v530
          %v872 = vunpack.c.l.b16 %v531
          %v873 = vunpack.c.h.b16 %v531
          %v874 = vunpack.c.l.b16 %v532
          %v875 = vunpack.c.h.b16 %v532
          %v876 = vunpack.c.l.b16 %v533
          %v877 = vunpack.c.h.b16 %v533
          %v878 = vunpack.c.l.b16 %v534
          %v879 = vunpack.c.h.b16 %v534
          %v880 = vunpack.c.l.b16 %v535
          %v881 = vunpack.c.h.b16 %v535
          %v882 = vunpack.c.l.b16 %v536
          %v883 = vunpack.c.h.b16 %v536
          %v884 = vunpack.c.l.b16 %v537
          %v885 = vunpack.c.h.b16 %v537
          %v886 = vunpack.c.l.b16 %v538
          %v887 = vunpack.c.h.b16 %v538
          %v888 = vunpack.c.l.b16 %v539
          %v889 = vunpack.c.h.b16 %v539
          %v890 = vunpack.c.l.b16 %v540
          %v891 = vunpack.c.h.b16 %v540
          %v892 = vunpack.c.l.b16 %v541
          %v893 = vunpack.c.h.b16 %v541
          %v894 = vunpack.c.l.b16 %v542
          %v895 = vunpack.c.h.b16 %v542
          %v896 = vunpack.c.l.b16 %v543
          %v897 = vunpack.c.h.b16 %v543
          %v898 = vunpack.c.l.b16 %v544
          %v899 = vunpack.c.h.b16 %v544
          %v900 = vunpack.c.l.b16 %v545
          %v901 = vunpack.c.h.b16 %v545
          %v902 = vunpack.c.l.b16 %v546
          %v903 = vunpack.c.h.b16 %v546
          %v904 = vunpack.c.l.b16 %v547
          %v905 = vunpack.c.h.b16 %v547
          %v906 = vunpack.c.l.b16 %v548
          %v907 = vunpack.c.h.b16 %v548
          %v908 = vunpack.c.l.b16 %v549
          %v909 = vunpack.c.h.b16 %v549
          %v910 = vunpack.c.l.b16 %v550
          %v911 = vunpack.c.h.b16 %v550
          %v912 = vunpack.c.l.b16 %v551
          %v913 = vunpack.c.h.b16 %v551
          %v914 = vunpack.c.l.b16 %v552
          %v915 = vunpack.c.h.b16 %v552
          %v916 = vunpack.c.l.b16 %v553
          %v917 = vunpack.c.h.b16 %v553
          %v918 = vunpack.c.l.b16 %v554
          %v919 = vunpack.c.h.b16 %v554
          %v920 = vunpack.c.l.b16 %v555
          %v921 = vunpack.c.h.b16 %v555
          %v922 = vunpack.c.l.b16 %v556
          %v923 = vunpack.c.h.b16 %v556
          %v924 = vunpack.c.l.b16 %v557
          %v925 = vunpack.c.h.b16 %v557
          %v926 = vunpack.c.l.b16 %v558
          %v927 = vunpack.c.h.b16 %v558
          %v928 = vunpack.c.l.b16 %v559
          %v929 = vunpack.c.h.b16 %v559
          %v930 = vunpack.c.l.b16 %v560
          %v931 = vunpack.c.h.b16 %v560
          %v932 = vunpack.c.l.b16 %v561
          %v933 = vunpack.c.h.b16 %v561
          %v934 = vunpack.c.l.b16 %v562
          %v935 = vunpack.c.h.b16 %v562
          %v936 = vunpack.c.l.b16 %v563
          %v937 = vunpack.c.h.b16 %v563
          %v938 = vunpack.c.l.b16 %v564
          %v939 = vunpack.c.h.b16 %v564
          %v940 = vunpack.c.l.b16 %v565
          %v941 = vunpack.c.h.b16 %v565
          %v942 = vunpack.c.l.b16 %v566
          %v943 = vunpack.c.h.b16 %v566
          %v944 = vunpack.c.l.b16 %v567
          %v945 = vunpack.c.h.b16 %v567
          %v946 = vunpack.c.l.b16 %v568
          %v947 = vunpack.c.h.b16 %v568
          %v948 = vunpack.c.l.b16 %v569
          %v949 = vunpack.c.h.b16 %v569
          %v950 = vunpack.c.l.b16 %v570
          %v951 = vunpack.c.h.b16 %v570
          %v952 = vunpack.c.l.b16 %v571
          %v953 = vunpack.c.h.b16 %v571
          %v954 = vunpack.c.l.b16 %v572
          %v955 = vunpack.c.h.b16 %v572
          %v956 = vunpack.c.l.b16 %v573
          %v957 = vunpack.c.h.b16 %v573
          %v958 = vunpack.c.l.b16 %v574
          %v959 = vunpack.c.h.b16 %v574
          %v960 = vunpack.c.l.b16 %v575
          %v961 = vunpack.c.h.b16 %v575
          %v962 = vunpack.c.l.b16 %v576
          %v963 = vunpack.c.h.b16 %v576
          %v964 = vunpack.c.l.b16 %v577
          %v965 = vunpack.c.h.b16 %v577
          %v966 = vunpack.c.l.b16 %v578
          %v967 = vunpack.c.h.b16 %v578
          %v968 = vunpack.c.l.b16 %v579
          %v969 = vunpack.c.h.b16 %v579
          %v970 = vunpack.c.l.b16 %v580
          %v971 = vunpack.c.h.b16 %v580
          %v972 = vunpack.c.l.b16 %v581
          %v973 = vunpack.c.h.b16 %v581
          %v974 = vunpack.c.l.b16 %v582
          %v975 = vunpack.c.h.b16 %v582
          %v976 = vunpack.c.l.b16 %v583
          %v977 = vunpack.c.h.b16 %v583
          %v978 = vunpack.c.l.b16 %v584
          %v979 = vunpack.c.h.b16 %v584
          %v980 = vunpack.c.l.b16 %v585
          %v981 = vunpack.c.h.b16 %v585
          %v982 = vpack.c.b16 %v730, %v726
          %v983 = vpack.c.b16 %v731, %v727
          %v984 = vpack.c.b16 %v732, %v728
          %v985 = vpack.c.b16 %v733, %v729
          %v986 = vpack.c.b16 %v738, %v734
          %v987 = vpack.c.b16 %v739, %v735
          %v988 = vpack.c.b16 %v740, %v736
          %v989 = vpack.c.b16 %v741, %v737
          %v990 = vpack.c.b16 %v746, %v742
          %v991 = vpack.c.b16 %v747, %v743
          %v992 = vpack.c.b16 %v748, %v744
          %v993 = vpack.c.b16 %v749, %v745
          %v994 = vpack.c.b16 %v754, %v750
          %v995 = vpack.c.b16 %v755, %v751
          %v996 = vpack.c.b16 %v756, %v752
          %v997 = vpack.c.b16 %v757, %v753
          %v998 = vpack.c.b16 %v762, %v758
          %v999 = vpack.c.b16 %v763, %v759
          %v1000 = vpack.c.b16 %v764, %v760
          %v1001 = vpack.c.b16 %v765, %v761
          %v1002 = vpack.c.b16 %v770, %v766
          %v1003 = vpack.c.b16 %v771, %v767
          %v1004 = vpack.c.b16 %v772, %v768
          %v1005 = vpack.c.b16 %v773, %v769
          %v1006 = vpack.c.b16 %v778, %v774
          %v1007 = vpack.c.b16 %v779, %v775
          %v1008 = vpack.c.b16 %v780, %v776
          %v1009 = vpack.c.b16 %v781, %v777
          %v1010 = vpack.c.b16 %v786, %v782
          %v1011 = vpack.c.b16 %v787, %v783
          %v1012 = vpack.c.b16 %v788, %v784
          %v1013 = vpack.c.b16 %v789, %v785
          %v1014 = vpack.c.b16 %v794, %v790
          %v1015 = vpack.c.b16 %v795, %v791
          %v1016 = vpack.c.b16 %v796, %v792
          %v1017 = vpack.c.b16 %v797, %v793
          %v1018 = vpack.c.b16 %v802, %v798
          %v1019 = vpack.c.b16 %v803, %v799
          %v1020 = vpack.c.b16 %v804, %v800
          %v1021 = vpack.c.b16 %v805, %v801
          %v1022 = vpack.c.b16 %v810, %v806
          %v1023 = vpack.c.b16 %v811, %v807
          %v1024 = vpack.c.b16 %v812, %v808
          %v1025 = vpack.c.b16 %v813, %v809
          %v1026 = vpack.c.b16 %v818, %v814
          %v1027 = vpack.c.b16 %v819, %v815
          %v1028 = vpack.c.b16 %v820, %v816
          %v1029 = vpack.c.b16 %v821, %v817
          %v1030 = vpack.c.b16 %v826, %v822
          %v1031 = vpack.c.b16 %v827, %v823
          %v1032 = vpack.c.b16 %v828, %v824
          %v1033 = vpack.c.b16 %v829, %v825
          %v1034 = vpack.c.b16 %v834, %v830
          %v1035 = vpack.c.b16 %v835, %v831
          %v1036 = vpack.c.b16 %v836, %v832
          %v1037 = vpack.c.b16 %v837, %v833
          %v1038 = vpack.c.b16 %v842, %v838
          %v1039 = vpack.c.b16 %v843, %v839
          %v1040 = vpack.c.b16 %v844, %v840
          %v1041 = vpack.c.b16 %v845, %v841
          %v1042 = vpack.c.b16 %v850, %v846
          %v1043 = vpack.c.b16 %v851, %v847
          %v1044 = vpack.c.b16 %v852, %v848
          %v1045 = vpack.c.b16 %v853, %v849
          %v1046 = vpack.c.b16 %v858, %v854
          %v1047 = vpack.c.b16 %v859, %v855
          %v1048 = vpack.c.b16 %v860, %v856
          %v1049 = vpack.c.b16 %v861, %v857
          %v1050 = vpack.c.b16 %v866, %v862
          %v1051 = vpack.c.b16 %v867, %v863
          %v1052 = vpack.c.b16 %v868, %v864
          %v1053 = vpack.c.b16 %v869, %v865
          %v1054 = vpack.c.b16 %v874, %v870
          %v1055 = vpack.c.b16 %v875, %v871
          %v1056 = vpack.c.b16 %v876, %v872
          %v1057 = vpack.c.b16 %v877, %v873
          %v1058 = vpack.c.b16 %v882, %v878
          %v1059 = vpack.c.b16 %v883, %v879
          %v1060 = vpack.c.b16 %v884, %v880
          %v1061 = vpack.c.b16 %v885, %v881
          %v1062 = vpack.c.b16 %v890, %v886
          %v1063 = vpack.c.b16 %v891, %v887
          %v1064 = vpack.c.b16 %v892, %v888
          %v1065 = vpack.c.b16 %v893, %v889
          %v1066 = vpack.c.b16 %v898, %v894
          %v1067 = vpack.c.b16 %v899, %v895
          %v1068 = vpack.c.b16 %v900, %v896
          %v1069 = vpack.c.b16 %v901, %v897
          %v1070 = vpack.c.b16 %v906, %v902
          %v1071 = vpack.c.b16 %v907, %v903
          %v1072 = vpack.c.b16 %v908, %v904
          %v1073 = vpack.c.b16 %v909, %v905
          %v1074 = vpack.c.b16 %v914, %v910
          %v1075 = vpack.c.b16 %v915, %v911
          %v1076 = vpack.c.b16 %v916, %v912
          %v1077 = vpack.c.b16 %v917, %v913
          %v1078 = vpack.c.b16 %v922, %v918
          %v1079 = vpack.c.b16 %v923, %v919
          %v1080 = vpack.c.b16 %v924, %v920
          %v1081 = vpack.c.b16 %v925, %v921
          %v1082 = vpack.c.b16 %v930, %v926
          %v1083 = vpack.c.b16 %v931, %v927
          %v1084 = vpack.c.b16 %v932, %v928
          %v1085 = vpack.c.b16 %v933, %v929
          %v1086 = vpack.c.b16 %v938, %v934
          %v1087 = vpack.c.b16 %v939, %v935
          %v1088 = vpack.c.b16 %v940, %v936
          %v1089 = vpack.c.b16 %v941, %v937
          %v1090 = vpack.c.b16 %v946, %v942
          %v1091 = vpack.c.b16 %v947, %v943
          %v1092 = vpack.c.b16 %v948, %v944
          %v1093 = vpack.c.b16 %v949, %v945
          %v1094 = vpack.c.b16 %v954, %v950
          %v1095 = vpack.c.b16 %v955, %v951
          %v1096 = vpack.c.b16 %v956, %v952
          %v1097 = vpack.c.b16 %v957, %v953
          %v1098 = vpack.c.b16 %v962, %v958
          %v1099 = vpack.c.b16 %v963, %v959
          %v1100 = vpack.c.b16 %v964, %v960
          %v1101 = vpack.c.b16 %v965, %v961
          %v1102 = vpack.c.b16 %v970, %v966
          %v1103 = vpack.c.b16 %v971, %v967
          %v1104 = vpack.c.b16 %v972, %v968
          %v1105 = vpack.c.b16 %v973, %v969
          %v1106 = vpack.c.b16 %v978, %v974
          %v1107 = vpack.c.b16 %v979, %v975
          %v1108 = vpack.c.b16 %v980, %v976
          %v1109 = vpack.c.b16 %v981, %v977
          %1238 = vmatpush.bf16.msra.mxu0 %v1010
          %1239 = vmatpush.bf16.msra.mxu0 %v1006
          %1240 = vmatpush.bf16.msra.mxu0 %v1002
          %1241 = vmatpush.bf16.msra.mxu0 %v998
          %1242 = vmatpush.bf16.msra.mxu0 %v994
          %1243 = vmatpush.bf16.msra.mxu0 %v990
          %1244 = vmatpush.bf16.msra.mxu0 %v986
          %1245 = vmatpush.bf16.msra.mxu0 %v982
          %1246 = vmatmul.bf16.gmra.mxu0 %v454
          %v1247 = vpop.f32.mrf.mxu0
          %v1248 = vadd.f32 %v590, %v1247
          %v1249 = vpop.f32.mrf.mxu0
          %1250 = vdwg.mxu0
          %1251 = vmatpush.bf16.msra.mxu0 %v1042
          %1252 = vmatpush.bf16.msra.mxu0 %v1038
          %1253 = vmatpush.bf16.msra.mxu0 %v1034
          %1254 = vmatpush.bf16.msra.mxu0 %v1030
          %1255 = vmatpush.bf16.msra.mxu0 %v1026
          %1256 = vmatpush.bf16.msra.mxu0 %v1022
          %1257 = vmatpush.bf16.msra.mxu0 %v1018
          %1258 = vmatpush.bf16.msra.mxu0 %v1014
          %1259 = vmatmul.bf16.gmra.mxu0 %v455
          %v1260 = vpop.f32.mrf.mxu0
          %v1261 = vadd.f32 %v1248, %v1260
          %v1262 = vpop.f32.mrf.mxu0
          %1263 = vdwg.mxu0
          %1264 = vmatpush.bf16.msra.mxu0 %v1074
          %1265 = vmatpush.bf16.msra.mxu0 %v1070
          %1266 = vmatpush.bf16.msra.mxu0 %v1066
          %1267 = vmatpush.bf16.msra.mxu0 %v1062
          %1268 = vmatpush.bf16.msra.mxu0 %v1058
          %1269 = vmatpush.bf16.msra.mxu0 %v1054
          %1270 = vmatpush.bf16.msra.mxu0 %v1050
          %1271 = vmatpush.bf16.msra.mxu0 %v1046
          %1272 = vmatmul.bf16.gmra.mxu0 %v456
          %v1273 = vpop.f32.mrf.mxu0
          %v1274 = vadd.f32 %v1261, %v1273
          %v1275 = vpop.f32.mrf.mxu0
          %1276 = vdwg.mxu0
          %1277 = vmatpush.bf16.msra.mxu0 %v1106
          %1278 = vmatpush.bf16.msra.mxu0 %v1102
          %1279 = vmatpush.bf16.msra.mxu0 %v1098
          %1280 = vmatpush.bf16.msra.mxu0 %v1094
          %1281 = vmatpush.bf16.msra.mxu0 %v1090
          %1282 = vmatpush.bf16.msra.mxu0 %v1086
          %1283 = vmatpush.bf16.msra.mxu0 %v1082
          %1284 = vmatpush.bf16.msra.mxu0 %v1078
          %1285 = vmatmul.bf16.gmra.mxu0 %v457
          %v1286 = vpop.f32.mrf.mxu0
          %v1287 = vadd.f32 %v1274, %v1286
          %v1288 = vpop.f32.mrf.mxu0
          %1289 = vdwg.mxu0
          %1290 = vmatpush.bf16.msra.mxu0 %v1011
          %1291 = vmatpush.bf16.msra.mxu0 %v1007
          %1292 = vmatpush.bf16.msra.mxu0 %v1003
          %1293 = vmatpush.bf16.msra.mxu0 %v999
          %1294 = vmatpush.bf16.msra.mxu0 %v995
          %1295 = vmatpush.bf16.msra.mxu0 %v991
          %1296 = vmatpush.bf16.msra.mxu0 %v987
          %1297 = vmatpush.bf16.msra.mxu0 %v983
          %1298 = vmatmul.bf16.gmra.mxu0 %v454
          %v1299 = vpop.f32.mrf.mxu0
          %v1300 = vadd.f32 %v591, %v1299
          %v1301 = vpop.f32.mrf.mxu0
          %1302 = vdwg.mxu0
          %1303 = vmatpush.bf16.msra.mxu0 %v1043
          %1304 = vmatpush.bf16.msra.mxu0 %v1039
          %1305 = vmatpush.bf16.msra.mxu0 %v1035
          %1306 = vmatpush.bf16.msra.mxu0 %v1031
          %1307 = vmatpush.bf16.msra.mxu0 %v1027
          %1308 = vmatpush.bf16.msra.mxu0 %v1023
          %1309 = vmatpush.bf16.msra.mxu0 %v1019
          %1310 = vmatpush.bf16.msra.mxu0 %v1015
          %1311 = vmatmul.bf16.gmra.mxu0 %v455
          %v1312 = vpop.f32.mrf.mxu0
          %v1313 = vadd.f32 %v1300, %v1312
          %v1314 = vpop.f32.mrf.mxu0
          %1315 = vdwg.mxu0
          %1316 = vmatpush.bf16.msra.mxu0 %v1075
          %1317 = vmatpush.bf16.msra.mxu0 %v1071
          %1318 = vmatpush.bf16.msra.mxu0 %v1067
          %1319 = vmatpush.bf16.msra.mxu0 %v1063
          %1320 = vmatpush.bf16.msra.mxu0 %v1059
          %1321 = vmatpush.bf16.msra.mxu0 %v1055
          %1322 = vmatpush.bf16.msra.mxu0 %v1051
          %1323 = vmatpush.bf16.msra.mxu0 %v1047
          %1324 = vmatmul.bf16.gmra.mxu0 %v456
          %v1325 = vpop.f32.mrf.mxu0
          %v1326 = vadd.f32 %v1313, %v1325
          %v1327 = vpop.f32.mrf.mxu0
          %1328 = vdwg.mxu0
          %1329 = vmatpush.bf16.msra.mxu0 %v1107
          %1330 = vmatpush.bf16.msra.mxu0 %v1103
          %1331 = vmatpush.bf16.msra.mxu0 %v1099
          %1332 = vmatpush.bf16.msra.mxu0 %v1095
          %1333 = vmatpush.bf16.msra.mxu0 %v1091
          %1334 = vmatpush.bf16.msra.mxu0 %v1087
          %1335 = vmatpush.bf16.msra.mxu0 %v1083
          %1336 = vmatpush.bf16.msra.mxu0 %v1079
          %1337 = vmatmul.bf16.gmra.mxu0 %v457
          %v1338 = vpop.f32.mrf.mxu0
          %v1339 = vadd.f32 %v1326, %v1338
          %v1340 = vpop.f32.mrf.mxu0
          %1341 = vdwg.mxu0
          %1342 = vmatpush.bf16.msra.mxu0 %v1012
          %1343 = vmatpush.bf16.msra.mxu0 %v1008
          %1344 = vmatpush.bf16.msra.mxu0 %v1004
          %1345 = vmatpush.bf16.msra.mxu0 %v1000
          %1346 = vmatpush.bf16.msra.mxu0 %v996
          %1347 = vmatpush.bf16.msra.mxu0 %v992
          %1348 = vmatpush.bf16.msra.mxu0 %v988
          %1349 = vmatpush.bf16.msra.mxu0 %v984
          %1350 = vmatmul.bf16.gmra.mxu0 %v454
          %v1351 = vpop.f32.mrf.mxu0
          %v1352 = vadd.f32 %v592, %v1351
          %v1353 = vpop.f32.mrf.mxu0
          %1354 = vdwg.mxu0
          %1355 = vmatpush.bf16.msra.mxu0 %v1044
          %1356 = vmatpush.bf16.msra.mxu0 %v1040
          %1357 = vmatpush.bf16.msra.mxu0 %v1036
          %1358 = vmatpush.bf16.msra.mxu0 %v1032
          %1359 = vmatpush.bf16.msra.mxu0 %v1028
          %1360 = vmatpush.bf16.msra.mxu0 %v1024
          %1361 = vmatpush.bf16.msra.mxu0 %v1020
          %1362 = vmatpush.bf16.msra.mxu0 %v1016
          %1363 = vmatmul.bf16.gmra.mxu0 %v455
          %v1364 = vpop.f32.mrf.mxu0
          %v1365 = vadd.f32 %v1352, %v1364
          %v1366 = vpop.f32.mrf.mxu0
          %1367 = vdwg.mxu0
          %1368 = vmatpush.bf16.msra.mxu0 %v1076
          %1369 = vmatpush.bf16.msra.mxu0 %v1072
          %1370 = vmatpush.bf16.msra.mxu0 %v1068
          %1371 = vmatpush.bf16.msra.mxu0 %v1064
          %1372 = vmatpush.bf16.msra.mxu0 %v1060
          %1373 = vmatpush.bf16.msra.mxu0 %v1056
          %1374 = vmatpush.bf16.msra.mxu0 %v1052
          %1375 = vmatpush.bf16.msra.mxu0 %v1048
          %1376 = vmatmul.bf16.gmra.mxu0 %v456
          %v1377 = vpop.f32.mrf.mxu0
          %v1378 = vadd.f32 %v1365, %v1377
          %v1379 = vpop.f32.mrf.mxu0
          %1380 = vdwg.mxu0
          %1381 = vmatpush.bf16.msra.mxu0 %v1108
          %1382 = vmatpush.bf16.msra.mxu0 %v1104
          %1383 = vmatpush.bf16.msra.mxu0 %v1100
          %1384 = vmatpush.bf16.msra.mxu0 %v1096
          %1385 = vmatpush.bf16.msra.mxu0 %v1092
          %1386 = vmatpush.bf16.msra.mxu0 %v1088
          %1387 = vmatpush.bf16.msra.mxu0 %v1084
          %1388 = vmatpush.bf16.msra.mxu0 %v1080
          %1389 = vmatmul.bf16.gmra.mxu0 %v457
          %v1390 = vpop.f32.mrf.mxu0
          %v1391 = vadd.f32 %v1378, %v1390
          %v1392 = vpop.f32.mrf.mxu0
          %1393 = vdwg.mxu0
          %1394 = vmatpush.bf16.msra.mxu0 %v1013
          %1395 = vmatpush.bf16.msra.mxu0 %v1009
          %1396 = vmatpush.bf16.msra.mxu0 %v1005
          %1397 = vmatpush.bf16.msra.mxu0 %v1001
          %1398 = vmatpush.bf16.msra.mxu0 %v997
          %1399 = vmatpush.bf16.msra.mxu0 %v993
          %1400 = vmatpush.bf16.msra.mxu0 %v989
          %1401 = vmatpush.bf16.msra.mxu0 %v985
          %1402 = vmatmul.bf16.gmra.mxu0 %v454
          %v1403 = vpop.f32.mrf.mxu0
          %v1404 = vadd.f32 %v593, %v1403
          %v1405 = vpop.f32.mrf.mxu0
          %1406 = vdwg.mxu0
          %1407 = vmatpush.bf16.msra.mxu0 %v1045
          %1408 = vmatpush.bf16.msra.mxu0 %v1041
          %1409 = vmatpush.bf16.msra.mxu0 %v1037
          %1410 = vmatpush.bf16.msra.mxu0 %v1033
          %1411 = vmatpush.bf16.msra.mxu0 %v1029
          %1412 = vmatpush.bf16.msra.mxu0 %v1025
          %1413 = vmatpush.bf16.msra.mxu0 %v1021
          %1414 = vmatpush.bf16.msra.mxu0 %v1017
          %1415 = vmatmul.bf16.gmra.mxu0 %v455
          %v1416 = vpop.f32.mrf.mxu0
          %v1417 = vadd.f32 %v1404, %v1416
          %v1418 = vpop.f32.mrf.mxu0
          %1419 = vdwg.mxu0
          %1420 = vmatpush.bf16.msra.mxu0 %v1077
          %1421 = vmatpush.bf16.msra.mxu0 %v1073
          %1422 = vmatpush.bf16.msra.mxu0 %v1069
          %1423 = vmatpush.bf16.msra.mxu0 %v1065
          %1424 = vmatpush.bf16.msra.mxu0 %v1061
          %1425 = vmatpush.bf16.msra.mxu0 %v1057
          %1426 = vmatpush.bf16.msra.mxu0 %v1053
          %1427 = vmatpush.bf16.msra.mxu0 %v1049
          %1428 = vmatmul.bf16.gmra.mxu0 %v456
          %v1429 = vpop.f32.mrf.mxu0
          %v1430 = vadd.f32 %v1417, %v1429
          %v1431 = vpop.f32.mrf.mxu0
          %1432 = vdwg.mxu0
          %1433 = vmatpush.bf16.msra.mxu0 %v1109
          %1434 = vmatpush.bf16.msra.mxu0 %v1105
          %1435 = vmatpush.bf16.msra.mxu0 %v1101
          %1436 = vmatpush.bf16.msra.mxu0 %v1097
          %1437 = vmatpush.bf16.msra.mxu0 %v1093
          %1438 = vmatpush.bf16.msra.mxu0 %v1089
          %1439 = vmatpush.bf16.msra.mxu0 %v1085
          %1440 = vmatpush.bf16.msra.mxu0 %v1081
          %1441 = vmatmul.bf16.gmra.mxu0 %v457
          %v1442 = vpop.f32.mrf.mxu0
          %v1443 = vadd.f32 %v1430, %v1442
          %v1444 = vpop.f32.mrf.mxu0
          %1445 = vdwg.mxu0
          %v1446 = vmax.f32 %v1287, 0.0
          %v1447 = vmax.f32 %v1339, 0.0
          %v1448 = vmax.f32 %v1391, 0.0
          %v1449 = vmax.f32 %v1443, 0.0
          %1450 = vst [vmem:[#allocation2] sm:$0xff] %v1446
          %1451 = vst [vmem:[#allocation2 + $0x8] sm:$0xff] %v1447
          %1452 = vst [vmem:[#allocation2 + $0x10] sm:$0xff] %v1448
          %1453 = vst [vmem:[#allocation2 + $0x18] sm:$0xff] %v1449
        $region68: #{tpu_custom_call.1} parent=39 // pred_fallthru
          _
        %p1454 = scmp.eq.s32.totalorder %s20, 7
        // Predicated region
        $region69: #{tpu_custom_call.1} parent=39 // pred_check
          %p1455 = pneg %p1454
        $region70: #{tpu_custom_call.1} parent=39 // pred_check_branch
          %1457 = sbr.rel (%p1455) target = $region72
        $region71: #{tpu_custom_call.1} parent=39 // pred_region
          %v1458 = vld [vmem:[#allocation2] sm:$0xff]
          %v1459 = vld [vmem:[#allocation2 + $0x8] sm:$0xff]
          %v1460 = vld [vmem:[#allocation2 + $0x10] sm:$0xff]
          %v1461 = vld [vmem:[#allocation2 + $0x18] sm:$0xff]
          %v1462 = vpack.c.bf16 %v1458, %v1458
          %v1463 = vpack.c.bf16 %v1459, %v1459
          %v1464 = vpack.c.bf16 %v1460, %v1460
          %v1465 = vpack.c.bf16 %v1461, %v1461
          %v1466 = vld [vmem:[#allocation9] sm:$0xf]
          %v1467 = vld [vmem:[#allocation9 + $0x4] sm:$0xf]
          %v1468 = vld [vmem:[#allocation9 + $0x8] sm:$0xf]
          %v1469 = vld [vmem:[#allocation9 + $0xc] sm:$0xf]
          %v1470 = vld [vmem:[#allocation9 + $0x10] sm:$0xf]
          %v1471 = vld [vmem:[#allocation9 + $0x14] sm:$0xf]
          %v1472 = vld [vmem:[#allocation9 + $0x18] sm:$0xf]
          %v1473 = vld [vmem:[#allocation9 + $0x1c] sm:$0xf]
          %v1474 = vld [vmem:[#allocation9 + $0x20] sm:$0xf]
          %v1475 = vld [vmem:[#allocation9 + $0x24] sm:$0xf]
          %v1476 = vld [vmem:[#allocation9 + $0x28] sm:$0xf]
          %v1477 = vld [vmem:[#allocation9 + $0x2c] sm:$0xf]
          %v1478 = vld [vmem:[#allocation9 + $0x30] sm:$0xf]
          %v1479 = vld [vmem:[#allocation9 + $0x34] sm:$0xf]
          %v1480 = vld [vmem:[#allocation9 + $0x38] sm:$0xf]
          %v1481 = vld [vmem:[#allocation9 + $0x3c] sm:$0xf]
          %v1482 = vld [vmem:[#allocation9 + $0x40] sm:$0xf]
          %v1483 = vld [vmem:[#allocation9 + $0x44] sm:$0xf]
          %v1484 = vld [vmem:[#allocation9 + $0x48] sm:$0xf]
          %v1485 = vld [vmem:[#allocation9 + $0x4c] sm:$0xf]
          %v1486 = vld [vmem:[#allocation9 + $0x50] sm:$0xf]
          %v1487 = vld [vmem:[#allocation9 + $0x54] sm:$0xf]
          %v1488 = vld [vmem:[#allocation9 + $0x58] sm:$0xf]
          %v1489 = vld [vmem:[#allocation9 + $0x5c] sm:$0xf]
          %v1490 = vld [vmem:[#allocation9 + $0x60] sm:$0xf]
          %v1491 = vld [vmem:[#allocation9 + $0x64] sm:$0xf]
          %v1492 = vld [vmem:[#allocation9 + $0x68] sm:$0xf]
          %v1493 = vld [vmem:[#allocation9 + $0x6c] sm:$0xf]
          %v1494 = vld [vmem:[#allocation9 + $0x70] sm:$0xf]
          %v1495 = vld [vmem:[#allocation9 + $0x74] sm:$0xf]
          %v1496 = vld [vmem:[#allocation9 + $0x78] sm:$0xf]
          %v1497 = vld [vmem:[#allocation9 + $0x7c] sm:$0xf]
          %v1498 = vld [vmem:[#allocation9 + $0x80] sm:$0xf]
          %v1499 = vld [vmem:[#allocation9 + $0x84] sm:$0xf]
          %v1500 = vld [vmem:[#allocation9 + $0x88] sm:$0xf]
          %v1501 = vld [vmem:[#allocation9 + $0x8c] sm:$0xf]
          %v1502 = vld [vmem:[#allocation9 + $0x90] sm:$0xf]
          %v1503 = vld [vmem:[#allocation9 + $0x94] sm:$0xf]
          %v1504 = vld [vmem:[#allocation9 + $0x98] sm:$0xf]
          %v1505 = vld [vmem:[#allocation9 + $0x9c] sm:$0xf]
          %v1506 = vld [vmem:[#allocation9 + $0xa0] sm:$0xf]
          %v1507 = vld [vmem:[#allocation9 + $0xa4] sm:$0xf]
          %v1508 = vld [vmem:[#allocation9 + $0xa8] sm:$0xf]
          %v1509 = vld [vmem:[#allocation9 + $0xac] sm:$0xf]
          %v1510 = vld [vmem:[#allocation9 + $0xb0] sm:$0xf]
          %v1511 = vld [vmem:[#allocation9 + $0xb4] sm:$0xf]
          %v1512 = vld [vmem:[#allocation9 + $0xb8] sm:$0xf]
          %v1513 = vld [vmem:[#allocation9 + $0xbc] sm:$0xf]
          %v1514 = vld [vmem:[#allocation9 + $0xc0] sm:$0xf]
          %v1515 = vld [vmem:[#allocation9 + $0xc4] sm:$0xf]
          %v1516 = vld [vmem:[#allocation9 + $0xc8] sm:$0xf]
          %v1517 = vld [vmem:[#allocation9 + $0xcc] sm:$0xf]
          %v1518 = vld [vmem:[#allocation9 + $0xd0] sm:$0xf]
          %v1519 = vld [vmem:[#allocation9 + $0xd4] sm:$0xf]
          %v1520 = vld [vmem:[#allocation9 + $0xd8] sm:$0xf]
          %v1521 = vld [vmem:[#allocation9 + $0xdc] sm:$0xf]
          %v1522 = vld [vmem:[#allocation9 + $0xe0] sm:$0xf]
          %v1523 = vld [vmem:[#allocation9 + $0xe4] sm:$0xf]
          %v1524 = vld [vmem:[#allocation9 + $0xe8] sm:$0xf]
          %v1525 = vld [vmem:[#allocation9 + $0xec] sm:$0xf]
          %v1526 = vld [vmem:[#allocation9 + $0xf0] sm:$0xf]
          %v1527 = vld [vmem:[#allocation9 + $0xf4] sm:$0xf]
          %v1528 = vld [vmem:[#allocation9 + $0xf8] sm:$0xf]
          %v1529 = vld [vmem:[#allocation9 + $0xfc] sm:$0xf]
          %s1530 = scalar_lea.vmem [#allocation10], 28
          %v1531 = vld [vmem:[%s1530] sm:$0xf]
          %v1533 = vperm.slane %v1531, 0
          %v1599 = vunpack.c.l.b16 %v1466
          %v1600 = vunpack.c.l.b16 %v1467
          %v1601 = vunpack.c.l.b16 %v1468
          %v1602 = vunpack.c.l.b16 %v1469
          %v1603 = vunpack.c.l.b16 %v1470
          %v1604 = vunpack.c.l.b16 %v1471
          %v1605 = vunpack.c.l.b16 %v1472
          %v1606 = vunpack.c.l.b16 %v1473
          %v1607 = vunpack.c.l.b16 %v1474
          %v1608 = vunpack.c.l.b16 %v1475
          %v1609 = vunpack.c.l.b16 %v1476
          %v1610 = vunpack.c.l.b16 %v1477
          %v1611 = vunpack.c.l.b16 %v1478
          %v1612 = vunpack.c.l.b16 %v1479
          %v1613 = vunpack.c.l.b16 %v1480
          %v1614 = vunpack.c.l.b16 %v1481
          %v1615 = vunpack.c.l.b16 %v1482
          %v1616 = vunpack.c.l.b16 %v1483
          %v1617 = vunpack.c.l.b16 %v1484
          %v1618 = vunpack.c.l.b16 %v1485
          %v1619 = vunpack.c.l.b16 %v1486
          %v1620 = vunpack.c.l.b16 %v1487
          %v1621 = vunpack.c.l.b16 %v1488
          %v1622 = vunpack.c.l.b16 %v1489
          %v1623 = vunpack.c.l.b16 %v1490
          %v1624 = vunpack.c.l.b16 %v1491
          %v1625 = vunpack.c.l.b16 %v1492
          %v1626 = vunpack.c.l.b16 %v1493
          %v1627 = vunpack.c.l.b16 %v1494
          %v1628 = vunpack.c.l.b16 %v1495
          %v1629 = vunpack.c.l.b16 %v1496
          %v1630 = vunpack.c.l.b16 %v1497
          %v1631 = vunpack.c.l.b16 %v1498
          %v1632 = vunpack.c.l.b16 %v1499
          %v1633 = vunpack.c.l.b16 %v1500
          %v1634 = vunpack.c.l.b16 %v1501
          %v1635 = vunpack.c.l.b16 %v1502
          %v1636 = vunpack.c.l.b16 %v1503
          %v1637 = vunpack.c.l.b16 %v1504
          %v1638 = vunpack.c.l.b16 %v1505
          %v1639 = vunpack.c.l.b16 %v1506
          %v1640 = vunpack.c.l.b16 %v1507
          %v1641 = vunpack.c.l.b16 %v1508
          %v1642 = vunpack.c.l.b16 %v1509
          %v1643 = vunpack.c.l.b16 %v1510
          %v1644 = vunpack.c.l.b16 %v1511
          %v1645 = vunpack.c.l.b16 %v1512
          %v1646 = vunpack.c.l.b16 %v1513
          %v1647 = vunpack.c.l.b16 %v1514
          %v1648 = vunpack.c.l.b16 %v1515
          %v1649 = vunpack.c.l.b16 %v1516
          %v1650 = vunpack.c.l.b16 %v1517
          %v1651 = vunpack.c.l.b16 %v1518
          %v1652 = vunpack.c.l.b16 %v1519
          %v1653 = vunpack.c.l.b16 %v1520
          %v1654 = vunpack.c.l.b16 %v1521
          %v1655 = vunpack.c.l.b16 %v1522
          %v1656 = vunpack.c.l.b16 %v1523
          %v1657 = vunpack.c.l.b16 %v1524
          %v1658 = vunpack.c.l.b16 %v1525
          %v1659 = vunpack.c.l.b16 %v1526
          %v1660 = vunpack.c.l.b16 %v1527
          %v1661 = vunpack.c.l.b16 %v1528
          %v1662 = vunpack.c.l.b16 %v1529
          %v1663 = vpack.c.b16 %v1600, %v1599
          %v1664 = vpack.c.b16 %v1602, %v1601
          %v1665 = vpack.c.b16 %v1604, %v1603
          %v1666 = vpack.c.b16 %v1606, %v1605
          %v1667 = vpack.c.b16 %v1608, %v1607
          %v1668 = vpack.c.b16 %v1610, %v1609
          %v1669 = vpack.c.b16 %v1612, %v1611
          %v1670 = vpack.c.b16 %v1614, %v1613
          %v1671 = vpack.c.b16 %v1616, %v1615
          %v1672 = vpack.c.b16 %v1618, %v1617
          %v1673 = vpack.c.b16 %v1620, %v1619
          %v1674 = vpack.c.b16 %v1622, %v1621
          %v1675 = vpack.c.b16 %v1624, %v1623
          %v1676 = vpack.c.b16 %v1626, %v1625
          %v1677 = vpack.c.b16 %v1628, %v1627
          %v1678 = vpack.c.b16 %v1630, %v1629
          %v1679 = vpack.c.b16 %v1632, %v1631
          %v1680 = vpack.c.b16 %v1634, %v1633
          %v1681 = vpack.c.b16 %v1636, %v1635
          %v1682 = vpack.c.b16 %v1638, %v1637
          %v1683 = vpack.c.b16 %v1640, %v1639
          %v1684 = vpack.c.b16 %v1642, %v1641
          %v1685 = vpack.c.b16 %v1644, %v1643
          %v1686 = vpack.c.b16 %v1646, %v1645
          %v1687 = vpack.c.b16 %v1648, %v1647
          %v1688 = vpack.c.b16 %v1650, %v1649
          %v1689 = vpack.c.b16 %v1652, %v1651
          %v1690 = vpack.c.b16 %v1654, %v1653
          %v1691 = vpack.c.b16 %v1656, %v1655
          %v1692 = vpack.c.b16 %v1658, %v1657
          %v1693 = vpack.c.b16 %v1660, %v1659
          %v1694 = vpack.c.b16 %v1662, %v1661
          %1727 = vmatpush.bf16.msra.mxu0 %v1670
          %1728 = vmatpush.bf16.msra.mxu0 %v1669
          %1729 = vmatpush.bf16.msra.mxu0 %v1668
          %1730 = vmatpush.bf16.msra.mxu0 %v1667
          %1731 = vmatpush.bf16.msra.mxu0 %v1666
          %1732 = vmatpush.bf16.msra.mxu0 %v1665
          %1733 = vmatpush.bf16.msra.mxu0 %v1664
          %1734 = vmatpush.bf16.msra.mxu0 %v1663
          %1735 = vmatmul.bf16.gmra.mxu0 %v1462
          %v1736 = vpop.f32.mrf.mxu0
          %v1737 = vadd.f32 %v1533, %v1736
          %v1738 = vpop.f32.mrf.mxu0
          %1739 = vdwg.mxu0
          %1740 = vmatpush.bf16.msra.mxu0 %v1678
          %1741 = vmatpush.bf16.msra.mxu0 %v1677
          %1742 = vmatpush.bf16.msra.mxu0 %v1676
          %1743 = vmatpush.bf16.msra.mxu0 %v1675
          %1744 = vmatpush.bf16.msra.mxu0 %v1674
          %1745 = vmatpush.bf16.msra.mxu0 %v1673
          %1746 = vmatpush.bf16.msra.mxu0 %v1672
          %1747 = vmatpush.bf16.msra.mxu0 %v1671
          %1748 = vmatmul.bf16.gmra.mxu0 %v1463
          %v1749 = vpop.f32.mrf.mxu0
          %v1750 = vadd.f32 %v1737, %v1749
          %v1751 = vpop.f32.mrf.mxu0
          %1752 = vdwg.mxu0
          %1753 = vmatpush.bf16.msra.mxu0 %v1686
          %1754 = vmatpush.bf16.msra.mxu0 %v1685
          %1755 = vmatpush.bf16.msra.mxu0 %v1684
          %1756 = vmatpush.bf16.msra.mxu0 %v1683
          %1757 = vmatpush.bf16.msra.mxu0 %v1682
          %1758 = vmatpush.bf16.msra.mxu0 %v1681
          %1759 = vmatpush.bf16.msra.mxu0 %v1680
          %1760 = vmatpush.bf16.msra.mxu0 %v1679
          %1761 = vmatmul.bf16.gmra.mxu0 %v1464
          %v1762 = vpop.f32.mrf.mxu0
          %v1763 = vadd.f32 %v1750, %v1762
          %v1764 = vpop.f32.mrf.mxu0
          %1765 = vdwg.mxu0
          %1766 = vmatpush.bf16.msra.mxu0 %v1694
          %1767 = vmatpush.bf16.msra.mxu0 %v1693
          %1768 = vmatpush.bf16.msra.mxu0 %v1692
          %1769 = vmatpush.bf16.msra.mxu0 %v1691
          %1770 = vmatpush.bf16.msra.mxu0 %v1690
          %1771 = vmatpush.bf16.msra.mxu0 %v1689
          %1772 = vmatpush.bf16.msra.mxu0 %v1688
          %1773 = vmatpush.bf16.msra.mxu0 %v1687
          %1774 = vmatmul.bf16.gmra.mxu0 %v1465
          %v1775 = vpop.f32.mrf.mxu0
          %v1776 = vadd.f32 %v1763, %v1775
          %v1777 = vpop.f32.mrf.mxu0
          %1778 = vdwg.mxu0
          %1779 = vmax.xlane.f32.xlu0 %v1776
          %v1780 = vpop.xlane.xlu0 %1779
          %v1781 = vsub.f32 %v1776, %v1780
          %v1782 = vmul.f32 %v1781, 1.442695
          %v1783 = vpow.pop %v1782
          %1784 = vadd.xlane.f32.xlu0 %v1783
          %v1785 = vpop.xlane.xlu0 %1784
          %v1786 = vrcp.pop %v1785
          %v1787 = vmul.f32 %v1783, %v1786
          %1788 = vst [vmem:[#allocation12] sm:$0xff] %v1787
        $region72: #{tpu_custom_call.1} parent=39 // pred_fallthru
          _
        // Predicated region
        $region73: #{tpu_custom_call.1} parent=39 // pred_check
          %p1789 = pneg %p153
        $region74: #{tpu_custom_call.1} parent=39 // pred_check_branch
          %1791 = sbr.rel (%p1789) target = $region76
        $region75: #{tpu_custom_call.1} parent=39 // pred_region
          %1793 = vsyncadd [#allocation5], 0
          %s1795 = sshll.u32 [#allocation12], 4
          %s1796 = int_to_ptr.vmem [resolvable:$true] %s1795
          %s1797 = sshll.u32 %s5, 4
          %s1798 = int_to_ptr.hbm [resolvable:$true] %s1797
          %1800 = dma.vmem_to_hbm [thread:$0]  %s1796, 128, %s1798, [#allocation5]
        $region76: #{tpu_custom_call.1} parent=39 // pred_fallthru
          _
        // Predicated region
        $region77: #{tpu_custom_call.1} parent=39 // pred_check
          %p1801 = pneg %p153
        $region78: #{tpu_custom_call.1} parent=39 // pred_check_branch
          %1803 = sbr.rel (%p1801) target = $region80
        $region79: #{tpu_custom_call.1} parent=39 // pred_region
          %1805 = dma.done [#allocation5], 128
        $region80: #{tpu_custom_call.1} parent=39 // pred_fallthru
          _
      $region40: #{tpu_custom_call.1} parent=5 // pred_fallthru
        _
      %p1806 = scmp.le.s32.totalorder 2, %s15
      // Predicated region
      $region81: #{tpu_custom_call.1} parent=5 // pred_check
        %p1807 = pneg %p1806
      $region82: #{tpu_custom_call.1} parent=5 // pred_check_branch
        %1809 = sbr.rel (%p1807) target = $region84
      $region83: #{tpu_custom_call.1} parent=5 // pred_region
        %s1810 = ssub.s32 %s15, 2
      $region84: #{tpu_custom_call.1} parent=5 // pred_fallthru
        _
    $region6: #{tpu_custom_call.1} parent=1 // loop_footer
      %s19 = sadd.s32 1, %s15
    $region7: #{tpu_custom_call.1} parent=1 // loop_footer_branch
      %14 = sbr.rel target = $region3
    $region8: #{tpu_custom_call.1} parent=1 // loop_exit
      _
    %1811 = vsyncpa [#allocation4], 1
    %s1812 = scalar_lea.sflag [#allocation4], 1
    %1813 = vsyncpa %s1812, 1
    %1814 = vsyncpa [#allocation7], 1
    %1815 = vsyncpa [#allocation11], 1
    %1816 = vsyncpa [#allocation5], 1
    %s1817 = scalar_lea.sflag [#allocation5], 1
    %1818 = vsyncpa %s1817, 1

</llo_original>
